<compile_context>
chip_gen: v7x
topology: tpu7x:2x2x1
jax: 0.10.0
libtpu: 0.0.40
codegen_flags: <defaults>
</compile_context>

<pallas_src>
import numpy as np
import jax
import jax.numpy as jnp
from jax import lax
from jax.experimental import pallas as pl
from jax.experimental.pallas import tpu as pltpu

# MXU operand dtype (accumulation is always f32). Set to jnp.float32 only if
# bit-strict f32 convs are required; bf16 is right for v5e/v6e/v7x MXUs.
MATMUL_DTYPE = jnp.bfloat16


def _ffloordiv(v_i32, d):
    # Exact floor(v / d) for small non-negative int32 v via f32 math
    # (f32 error << 0.5/d margin) -- avoids vector integer division.
    return jnp.floor((v_i32.astype(jnp.float32) + 0.5) * (1.0 / d)).astype(jnp.int32)


# ----------------------------------------------------------------------------
# Fused Pallas kernel: whole ResidualModule for B_tile samples per grid step
# ----------------------------------------------------------------------------
def _make_fused_residual_kernel(H, W, C, num_layers, B_tile, Mpad):
    Hp, Wp = H + 2, W + 2
    HWp = H * Wp
    Ltot = B_tile * Mpad
    # tap t = dy*3 + dx -> lane offset in the padded-flat activation
    tap_offsets = [(dy - 1) * Wp + (dx - 1) for dy in range(3) for dx in range(3)]

    def kernel(x_ref, w_ref, scale_ref, bias_ref, o_ref, xcol_ref):
        # Interior mask over lanes (1 inside the HxW image, 0 on the halo ring
        # and the per-sample lane tail); computed once, reused by every stage.
        lane = lax.broadcasted_iota(jnp.int32, (1, Ltot), 1)
        m = lane if B_tile == 1 else lane - Mpad * _ffloordiv(lane, Mpad)
        row = _ffloordiv(m, Wp)
        col = m - Wp * row
        inside = (row >= 1) & (row <= H) & (col >= 1) & (col <= W)
        mask = jnp.where(inside, 1.0, 0.0)                      # (1, Ltot) f32

        def conv_bn_relu(a, layer):
            # im2col^T: 9 lane-rotated copies of the activation, each stored as
            # a sublane-aligned, full-lane-width bf16 strip -> one K=9*C MXU
            # matmul.  Roll wrap-around only lands in halo/tail lanes, which are
            # re-masked afterwards, so SAME zero padding stays exact.
            for t, off in enumerate(tap_offsets):
                strip = a if off == 0 else pltpu.roll(a, shift=(-off) % Ltot, axis=1)
                xcol_ref[t * C:(t + 1) * C, :] = strip.astype(MATMUL_DTYPE)
            acc = jnp.dot(w_ref[layer], xcol_ref[...],
                          preferred_element_type=jnp.float32)   # (C, Ltot) f32
            # Folded (conv bias + eval-mode BN) affine, then ReLU -- all f32.
            return jnp.maximum(acc * scale_ref[layer] + bias_ref[layer], 0.0)

        # Activation threaded through all 1 + 2*num_layers stages as a value;
        # halo + tail lanes are re-zeroed by `* mask` after every stage.
        a = x_ref[0]                                            # (C, Ltot) f32
        a = conv_bn_relu(a, 0) * mask                           # start_conv
        for b in range(num_layers):                             # BasicBlocks
            h = conv_bn_relu(a, 1 + 2 * b) * mask
            a = (conv_bn_relu(h, 2 + 2 * b) + a) * mask         # no ReLU after add
        # Lane-dense store of the interior rows (top/bottom halo rows dropped).
        for s in range(B_tile):
            o_ref[0, :, s * HWp:(s + 1) * HWp] = \
                a[:, s * Mpad + Wp: s * Mpad + Wp + HWp]

    return kernel


# ----------------------------------------------------------------------------
# Wrapper: one-time layout plumbing + single pallas_call
# ----------------------------------------------------------------------------
def residual_module_forward(x_nchw, params):
    N, Cin, H, W = x_nchw.shape
    C = params["start"]["w"].shape[-1]                  # num_features
    assert Cin <= C and C % 8 == 0
    num_layers = len(params["blocks"])
    L = 1 + 2 * num_layers
    Hp, Wp = H + 2, W + 2
    M = Hp * Wp
    Mpad = ((M + 127) // 128) * 128                     # lane-dense per-sample stride
    HWp = H * Wp

    # Samples per grid step: fold batch into the matmul lane dimension, but keep
    # >= 2 grid steps when N >= 2 (v7x has 2 TensorCores); cap for VMEM.
    B_tile = 1
    for bt in range(1, min(N, 8) + 1):
        if N % bt == 0 and (N == 1 or N // bt >= 2):
            B_tile = bt
    n_steps = N // B_tile
    Ltot = B_tile * Mpad

    # ---- input: NCHW -> (n_steps, C, B_tile*Mpad): channels on sublanes, ----
    # ---- padded-flat spatial (zero halo ring + zero lane tail) on lanes  ----
    x = x_nchw.astype(jnp.float32)
    x = jnp.pad(x, ((0, 0), (0, C - Cin), (0, 0), (0, 0)))      # Cin -> C
    x = jnp.pad(x, ((0, 0), (0, 0), (1, 1), (1, 1)))            # halo ring
    x = x.reshape(N, C, M)
    x = jnp.pad(x, ((0, 0), (0, 0), (0, Mpad - M)))             # lane tail
    x = (x.reshape(n_steps, B_tile, C, Mpad)
          .transpose(0, 2, 1, 3)
          .reshape(n_steps, C, Ltot))

    # ---- all conv weights stacked as (L, C, 9*C): y = W_layer @ x_colT ----
    w0 = jnp.pad(params["start"]["w"],
                 ((0, 0), (0, 0), (0, C - Cin), (0, 0)))        # zero in-ch pad
    ws = [w0] + [blk[k]["w"] for blk in params["blocks"]
                 for k in ("conv1", "conv2")]
    w_all = jnp.stack([w.reshape(9 * C, C).T for w in ws]).astype(MATMUL_DTYPE)
    scales = jnp.stack(
        [params["start"]["scale"]]
        + [blk[k]["scale"] for blk in params["blocks"] for k in ("conv1", "conv2")]
    ).reshape(L, C, 1).astype(jnp.float32)
    biases = jnp.stack(
        [params["start"]["bias"]]
        + [blk[k]["bias"] for blk in params["blocks"] for k in ("conv1", "conv2")]
    ).reshape(L, C, 1).astype(jnp.float32)

    kernel = _make_fused_residual_kernel(H, W, C, num_layers, B_tile, Mpad)

    out = pl.pallas_call(
        kernel,
        out_shape=jax.ShapeDtypeStruct((n_steps, C, B_tile * HWp), jnp.float32),
        grid=(n_steps,),
        in_specs=[
            pl.BlockSpec((1, C, Ltot), lambda s: (s, 0, 0)),    # activations
            pl.BlockSpec((L, C, 9 * C), lambda s: (0, 0, 0)),   # all conv weights
            pl.BlockSpec((L, C, 1), lambda s: (0, 0, 0)),       # folded BN scales
            pl.BlockSpec((L, C, 1), lambda s: (0, 0, 0)),       # folded BN biases
        ],
        out_specs=pl.BlockSpec((1, C, B_tile * HWp), lambda s: (s, 0, 0)),
        scratch_shapes=[pltpu.VMEM((9 * C, Ltot), MATMUL_DTYPE)],  # im2col^T (bf16)
        compiler_params=pltpu.CompilerParams(
            dimension_semantics=("parallel",),                  # batch across TCs
        ),
    )(x, w_all, scales, biases)

    # (n_steps, C, B_tile*H*Wp) -> NCHW interior (already channel-major)
    out = (out.reshape(n_steps, C, B_tile, H, Wp)
              .transpose(0, 2, 1, 3, 4)
              .reshape(N, C, H, Wp))[:, :, :, 1:1 + W]
    return out


# ----------------------------------------------------------------------------
# Parameter init (deterministic, synthetic) -- shapes follow the PyTorch module
# ----------------------------------------------------------------------------
def _init_conv_bn(key, cin, cout):
    k1, k2, k3, k4, k5, k6 = jax.random.split(key, 6)
    w = 0.1 * jax.random.normal(k1, (3, 3, cin, cout), jnp.float32)   # HWIO
    conv_b = 0.1 * jax.random.normal(k2, (cout,), jnp.float32)
    gamma = 1.0 + 0.1 * jax.random.normal(k3, (cout,), jnp.float32)
    beta = 0.1 * jax.random.normal(k4, (cout,), jnp.float32)
    run_mean = 0.1 * jax.random.normal(k5, (cout,), jnp.float32)
    run_var = 1.0 + 0.1 * jax.random.uniform(k6, (cout,), jnp.float32)
    eps = 1e-5
    eff_scale = gamma / jnp.sqrt(run_var + eps)
    eff_bias = (conv_b - run_mean) * eff_scale + beta
    return {"w": w, "scale": eff_scale, "bias": eff_bias}


def init_residual_module_params(key, in_size, num_layers, num_features=16):
    keys = jax.random.split(key, 1 + 2 * num_layers)
    params = {"start": _init_conv_bn(keys[0], in_size, num_features),
              "blocks": []}
    for l in range(num_layers):
        params["blocks"].append({
            "conv1": _init_conv_bn(keys[1 + 2 * l], num_features, num_features),
            "conv2": _init_conv_bn(keys[2 + 2 * l], num_features, num_features),
        })
    return params


# ----------------------------------------------------------------------------
# Pure-JAX reference with the SAME precision policy (bf16 MXU operands, f32
# accumulation, f32 BN/ReLU/residual) so the check is apples-to-apples.
# ----------------------------------------------------------------------------
def _ref_conv_bn_relu(x_nhwc, w_hwio, scale, bias):
    y = lax.conv_general_dilated(
        x_nhwc.astype(MATMUL_DTYPE), w_hwio.astype(MATMUL_DTYPE),
        window_strides=(1, 1), padding="SAME",
        dimension_numbers=("NHWC", "HWIO", "NHWC"),
        preferred_element_type=jnp.float32)
    y = y * scale[None, None, None, :] + bias[None, None, None, :]
    return jnp.maximum(y, 0.0)


def residual_module_reference(x_nchw, params):
    x = jnp.transpose(x_nchw, (0, 2, 3, 1)).astype(jnp.float32)
    p = params["start"]
    x = _ref_conv_bn_relu(x, p["w"], p["scale"], p["bias"])
    for blk in params["blocks"]:
        identity = x
        c1, c2 = blk["conv1"], blk["conv2"]
        out = _ref_conv_bn_relu(x, c1["w"], c1["scale"], c1["bias"])
        out = _ref_conv_bn_relu(out, c2["w"], c2["scale"], c2["bias"])
        x = out + identity
    return jnp.transpose(x, (0, 3, 1, 2))


# ----------------------------------------------------------------------------
if __name__ == "__main__":
    key = jax.random.PRNGKey(0)
    kx, kp = jax.random.split(key)

    # Spec-sized check: batch=2, in_channels=4, 16x16 image, 2 residual blocks.
    N, in_size, H, W = 2, 4, 16, 16
    num_layers, num_features = 2, 16
    x = jax.random.normal(kx, (N, in_size, H, W), jnp.float32)      # NCHW input
    params = init_residual_module_params(kp, in_size, num_layers, num_features)

    fwd = jax.jit(residual_module_forward)
    out = jax.block_until_ready(fwd(x, params))
    ref = jax.block_until_ready(residual_module_reference(x, params))
    assert out.shape == (N, num_features, H, W), out.shape
    np.testing.assert_allclose(np.asarray(out), np.asarray(ref),
                               rtol=1e-3, atol=1e-3)

    # Second check: exercises batch folding (B_tile=2 samples per grid step,
    # still 2 parallel grid steps) and a different image size.
    kx2, kp2 = jax.random.split(jax.random.PRNGKey(1))
    N2, in2, H2, W2, nl2 = 4, 3, 8, 8, 1
    x2 = jax.random.normal(kx2, (N2, in2, H2, W2), jnp.float32)
    params2 = init_residual_module_params(kp2, in2, nl2, num_features)
    out2 = jax.block_until_ready(jax.jit(residual_module_forward)(x2, params2))
    ref2 = jax.block_until_ready(residual_module_reference(x2, params2))
    assert out2.shape == (N2, num_features, H2, W2), out2.shape
    np.testing.assert_allclose(np.asarray(out2), np.asarray(ref2),
                               rtol=1e-3, atol=1e-3)

    print("KERNEL_OK")
</pallas_src>

<mosaic_0001>
module attributes {stable_mosaic.version = 11 : i64} {
  func.func @kernel(%arg0: i32, %arg1: memref<1x16x384xf32, #tpu.memory_space<vmem>>, %arg2: memref<5x16x144xbf16, #tpu.memory_space<vmem>>, %arg3: memref<5x16x1xf32, #tpu.memory_space<vmem>>, %arg4: memref<5x16x1xf32, #tpu.memory_space<vmem>>, %arg5: memref<1x16x288xf32, #tpu.memory_space<vmem>>, %arg6: memref<144x384xbf16, #tpu.memory_space<vmem>>) attributes {dimension_semantics = [#tpu.dimension_semantics<parallel>], iteration_bounds = array<i64: 2>, scalar_prefetch = 0 : i64, scratch_operands = 1 : i64, tpu.core_type = #tpu.core_type<tc>, window_params = [{transform_indices = @transform_0, window_bounds = array<i64: 1, 16, 384>}, {pipeline_mode = #tpu.pipeline_mode<synchronous>, transform_indices = @transform_1, window_bounds = array<i64: 5, 16, 144>}, {pipeline_mode = #tpu.pipeline_mode<synchronous>, transform_indices = @transform_2, window_bounds = array<i64: 5, 16, 1>}, {pipeline_mode = #tpu.pipeline_mode<synchronous>, transform_indices = @transform_3, window_bounds = array<i64: 5, 16, 1>}, {transform_indices = @transform_4, window_bounds = array<i64: 1, 16, 288>}]} {
    %0 = tpu.iota {dimensions = array<i32: 1>} : vector<1x384xi32>
    %1 = arith.sitofp %0 : vector<1x384xi32> to vector<1x384xf32>
    %cst = arith.constant 5.000000e-01 : f32
    %2 = vector.broadcast %cst : f32 to vector<1x384xf32>
    %3 = arith.addf %1, %2 : vector<1x384xf32>
    %cst_0 = arith.constant 0.055555556 : f32
    %4 = vector.broadcast %cst_0 : f32 to vector<1x384xf32>
    %5 = arith.mulf %3, %4 : vector<1x384xf32>
    %6 = math.floor %5 : vector<1x384xf32>
    %7 = arith.fptosi %6 : vector<1x384xf32> to vector<1x384xi32>
    %c18_i32 = arith.constant 18 : i32
    %8 = vector.broadcast %c18_i32 : i32 to vector<1x384xi32>
    %9 = arith.muli %8, %7 : vector<1x384xi32>
    %10 = arith.subi %0, %9 : vector<1x384xi32>
    %c1_i32 = arith.constant 1 : i32
    %11 = vector.broadcast %c1_i32 : i32 to vector<1x384xi32>
    %12 = arith.cmpi sge, %7, %11 : vector<1x384xi32>
    %c16_i32 = arith.constant 16 : i32
    %13 = vector.broadcast %c16_i32 : i32 to vector<1x384xi32>
    %14 = arith.cmpi sle, %7, %13 : vector<1x384xi32>
    %15 = arith.andi %12, %14 : vector<1x384xi1>
    %c1_i32_1 = arith.constant 1 : i32
    %16 = vector.broadcast %c1_i32_1 : i32 to vector<1x384xi32>
    %17 = arith.cmpi sge, %10, %16 : vector<1x384xi32>
    %18 = arith.andi %15, %17 : vector<1x384xi1>
    %c16_i32_2 = arith.constant 16 : i32
    %19 = vector.broadcast %c16_i32_2 : i32 to vector<1x384xi32>
    %20 = arith.cmpi sle, %10, %19 : vector<1x384xi32>
    %21 = arith.andi %18, %20 : vector<1x384xi1>
    %cst_3 = arith.constant 1.000000e+00 : f32
    %cst_4 = arith.constant 0.000000e+00 : f32
    %22 = vector.broadcast %cst_3 : f32 to vector<1x384xf32>
    %23 = vector.broadcast %cst_4 : f32 to vector<1x384xf32>
    %24 = arith.select %21, %22, %23 : vector<1x384xi1>, vector<1x384xf32>
    %c0 = arith.constant 0 : index
    %c0_5 = arith.constant 0 : index
    %c0_6 = arith.constant 0 : index
    %25 = vector.load %arg1[%c0, %c0_5, %c0_6] : memref<1x16x384xf32, #tpu.memory_space<vmem>>, vector<1x16x384xf32>
    %26 = vector.shape_cast %25 : vector<1x16x384xf32> to vector<16x384xf32>
    %c19_i32 = arith.constant 19 : i32
    %27 = tpu.dynamic_rotate %26 by %c19_i32 dim 1 : vector<16x384xf32>, i32 -> vector<16x384xf32>
    %28 = arith.truncf %27 : vector<16x384xf32> to vector<16x384xbf16>
    %c0_7 = arith.constant 0 : index
    %c0_8 = arith.constant 0 : index
    %29 = vector.load %arg6[%c0_7, %c0_8] : memref<144x384xbf16, #tpu.memory_space<vmem>>, vector<16x384xbf16>
    tpu.vector_store %arg6[%c0_7, %c0_8], %28 {strides = array<i32>} : memref<144x384xbf16, #tpu.memory_space<vmem>>, vector<16x384xbf16>,
    %c18_i32_9 = arith.constant 18 : i32
    %30 = tpu.dynamic_rotate %26 by %c18_i32_9 dim 1 : vector<16x384xf32>, i32 -> vector<16x384xf32>
    %31 = arith.truncf %30 : vector<16x384xf32> to vector<16x384xbf16>
    %c16 = arith.constant 16 : index
    %c0_10 = arith.constant 0 : index
    %32 = vector.load %arg6[%c16, %c0_10] : memref<144x384xbf16, #tpu.memory_space<vmem>>, vector<16x384xbf16>
    tpu.vector_store %arg6[%c16, %c0_10], %31 {strides = array<i32>} : memref<144x384xbf16, #tpu.memory_space<vmem>>, vector<16x384xbf16>,
    %c17_i32 = arith.constant 17 : i32
    %33 = tpu.dynamic_rotate %26 by %c17_i32 dim 1 : vector<16x384xf32>, i32 -> vector<16x384xf32>
    %34 = arith.truncf %33 : vector<16x384xf32> to vector<16x384xbf16>
    %c32 = arith.constant 32 : index
    %c0_11 = arith.constant 0 : index
    %35 = vector.load %arg6[%c32, %c0_11] : memref<144x384xbf16, #tpu.memory_space<vmem>>, vector<16x384xbf16>
    tpu.vector_store %arg6[%c32, %c0_11], %34 {strides = array<i32>} : memref<144x384xbf16, #tpu.memory_space<vmem>>, vector<16x384xbf16>,
    %c1_i32_12 = arith.constant 1 : i32
    %36 = tpu.dynamic_rotate %26 by %c1_i32_12 dim 1 : vector<16x384xf32>, i32 -> vector<16x384xf32>
    %37 = arith.truncf %36 : vector<16x384xf32> to vector<16x384xbf16>
    %c48 = arith.constant 48 : index
    %c0_13 = arith.constant 0 : index
    %38 = vector.load %arg6[%c48, %c0_13] : memref<144x384xbf16, #tpu.memory_space<vmem>>, vector<16x384xbf16>
    tpu.vector_store %arg6[%c48, %c0_13], %37 {strides = array<i32>} : memref<144x384xbf16, #tpu.memory_space<vmem>>, vector<16x384xbf16>,
    %39 = arith.truncf %26 : vector<16x384xf32> to vector<16x384xbf16>
    %c64 = arith.constant 64 : index
    %c0_14 = arith.constant 0 : index
    %40 = vector.load %arg6[%c64, %c0_14] : memref<144x384xbf16, #tpu.memory_space<vmem>>, vector<16x384xbf16>
    tpu.vector_store %arg6[%c64, %c0_14], %39 {strides = array<i32>} : memref<144x384xbf16, #tpu.memory_space<vmem>>, vector<16x384xbf16>,
    %c383_i32 = arith.constant 383 : i32
    %41 = tpu.dynamic_rotate %26 by %c383_i32 dim 1 : vector<16x384xf32>, i32 -> vector<16x384xf32>
    %42 = arith.truncf %41 : vector<16x384xf32> to vector<16x384xbf16>
    %c80 = arith.constant 80 : index
    %c0_15 = arith.constant 0 : index
    %43 = vector.load %arg6[%c80, %c0_15] : memref<144x384xbf16, #tpu.memory_space<vmem>>, vector<16x384xbf16>
    tpu.vector_store %arg6[%c80, %c0_15], %42 {strides = array<i32>} : memref<144x384xbf16, #tpu.memory_space<vmem>>, vector<16x384xbf16>,
    %c367_i32 = arith.constant 367 : i32
    %44 = tpu.dynamic_rotate %26 by %c367_i32 dim 1 : vector<16x384xf32>, i32 -> vector<16x384xf32>
    %45 = arith.truncf %44 : vector<16x384xf32> to vector<16x384xbf16>
    %c96 = arith.constant 96 : index
    %c0_16 = arith.constant 0 : index
    %46 = vector.load %arg6[%c96, %c0_16] : memref<144x384xbf16, #tpu.memory_space<vmem>>, vector<16x384xbf16>
    tpu.vector_store %arg6[%c96, %c0_16], %45 {strides = array<i32>} : memref<144x384xbf16, #tpu.memory_space<vmem>>, vector<16x384xbf16>,
    %c366_i32 = arith.constant 366 : i32
    %47 = tpu.dynamic_rotate %26 by %c366_i32 dim 1 : vector<16x384xf32>, i32 -> vector<16x384xf32>
    %48 = arith.truncf %47 : vector<16x384xf32> to vector<16x384xbf16>
    %c112 = arith.constant 112 : index
    %c0_17 = arith.constant 0 : index
    %49 = vector.load %arg6[%c112, %c0_17] : memref<144x384xbf16, #tpu.memory_space<vmem>>, vector<16x384xbf16>
    tpu.vector_store %arg6[%c112, %c0_17], %48 {strides = array<i32>} : memref<144x384xbf16, #tpu.memory_space<vmem>>, vector<16x384xbf16>,
    %c365_i32 = arith.constant 365 : i32
    %50 = tpu.dynamic_rotate %26 by %c365_i32 dim 1 : vector<16x384xf32>, i32 -> vector<16x384xf32>
    %51 = arith.truncf %50 : vector<16x384xf32> to vector<16x384xbf16>
    %c128 = arith.constant 128 : index
    %c0_18 = arith.constant 0 : index
    %52 = vector.load %arg6[%c128, %c0_18] : memref<144x384xbf16, #tpu.memory_space<vmem>>, vector<16x384xbf16>
    tpu.vector_store %arg6[%c128, %c0_18], %51 {strides = array<i32>} : memref<144x384xbf16, #tpu.memory_space<vmem>>, vector<16x384xbf16>,
    %c0_19 = arith.constant 0 : index
    %c0_20 = arith.constant 0 : index
    %c0_21 = arith.constant 0 : index
    %53 = vector.load %arg2[%c0_19, %c0_20, %c0_21] : memref<5x16x144xbf16, #tpu.memory_space<vmem>>, vector<1x16x144xbf16>
    %54 = vector.shape_cast %53 : vector<1x16x144xbf16> to vector<16x144xbf16>
    %c0_22 = arith.constant 0 : index
    %c0_23 = arith.constant 0 : index
    %55 = vector.load %arg6[%c0_22, %c0_23] : memref<144x384xbf16, #tpu.memory_space<vmem>>, vector<144x384xbf16>
    %cst_24 = arith.constant dense<0.000000e+00> : vector<16x384xf32>
    %56 = tpu.matmul %54, %55, %cst_24 {dimension_numbers = #tpu.dot_dimension_numbers<[1], [0], [0], [1], [0, 0, 1, 1], [], []>} : vector<16x144xbf16>, vector<144x384xbf16>, vector<16x384xf32> -> vector<16x384xf32>
    %c0_25 = arith.constant 0 : index
    %c0_26 = arith.constant 0 : index
    %c0_27 = arith.constant 0 : index
    %57 = vector.load %arg3[%c0_25, %c0_26, %c0_27] : memref<5x16x1xf32, #tpu.memory_space<vmem>>, vector<1x16x1xf32>
    %58 = vector.shape_cast %57 : vector<1x16x1xf32> to vector<16x1xf32>
    %59 = vector.broadcast %58 : vector<16x1xf32> to vector<16x384xf32>
    %60 = arith.mulf %56, %59 : vector<16x384xf32>
    %c0_28 = arith.constant 0 : index
    %c0_29 = arith.constant 0 : index
    %c0_30 = arith.constant 0 : index
    %61 = vector.load %arg4[%c0_28, %c0_29, %c0_30] : memref<5x16x1xf32, #tpu.memory_space<vmem>>, vector<1x16x1xf32>
    %62 = vector.shape_cast %61 : vector<1x16x1xf32> to vector<16x1xf32>
    %63 = vector.broadcast %62 : vector<16x1xf32> to vector<16x384xf32>
    %64 = arith.addf %60, %63 : vector<16x384xf32>
    %cst_31 = arith.constant 0.000000e+00 : f32
    %65 = vector.broadcast %cst_31 : f32 to vector<16x384xf32>
    %66 = arith.maximumf %64, %65 : vector<16x384xf32>
    %67 = vector.broadcast %24 : vector<1x384xf32> to vector<16x384xf32>
    %68 = arith.mulf %66, %67 : vector<16x384xf32>
    %c19_i32_32 = arith.constant 19 : i32
    %69 = tpu.dynamic_rotate %68 by %c19_i32_32 dim 1 : vector<16x384xf32>, i32 -> vector<16x384xf32>
    %70 = arith.truncf %69 : vector<16x384xf32> to vector<16x384xbf16>
    %c0_33 = arith.constant 0 : index
    %c0_34 = arith.constant 0 : index
    %71 = vector.load %arg6[%c0_33, %c0_34] : memref<144x384xbf16, #tpu.memory_space<vmem>>, vector<16x384xbf16>
    tpu.vector_store %arg6[%c0_33, %c0_34], %70 {strides = array<i32>} : memref<144x384xbf16, #tpu.memory_space<vmem>>, vector<16x384xbf16>,
    %c18_i32_35 = arith.constant 18 : i32
    %72 = tpu.dynamic_rotate %68 by %c18_i32_35 dim 1 : vector<16x384xf32>, i32 -> vector<16x384xf32>
    %73 = arith.truncf %72 : vector<16x384xf32> to vector<16x384xbf16>
    %c16_36 = arith.constant 16 : index
    %c0_37 = arith.constant 0 : index
    %74 = vector.load %arg6[%c16_36, %c0_37] : memref<144x384xbf16, #tpu.memory_space<vmem>>, vector<16x384xbf16>
    tpu.vector_store %arg6[%c16_36, %c0_37], %73 {strides = array<i32>} : memref<144x384xbf16, #tpu.memory_space<vmem>>, vector<16x384xbf16>,
    %c17_i32_38 = arith.constant 17 : i32
    %75 = tpu.dynamic_rotate %68 by %c17_i32_38 dim 1 : vector<16x384xf32>, i32 -> vector<16x384xf32>
    %76 = arith.truncf %75 : vector<16x384xf32> to vector<16x384xbf16>
    %c32_39 = arith.constant 32 : index
    %c0_40 = arith.constant 0 : index
    %77 = vector.load %arg6[%c32_39, %c0_40] : memref<144x384xbf16, #tpu.memory_space<vmem>>, vector<16x384xbf16>
    tpu.vector_store %arg6[%c32_39, %c0_40], %76 {strides = array<i32>} : memref<144x384xbf16, #tpu.memory_space<vmem>>, vector<16x384xbf16>,
    %c1_i32_41 = arith.constant 1 : i32
    %78 = tpu.dynamic_rotate %68 by %c1_i32_41 dim 1 : vector<16x384xf32>, i32 -> vector<16x384xf32>
    %79 = arith.truncf %78 : vector<16x384xf32> to vector<16x384xbf16>
    %c48_42 = arith.constant 48 : index
    %c0_43 = arith.constant 0 : index
    %80 = vector.load %arg6[%c48_42, %c0_43] : memref<144x384xbf16, #tpu.memory_space<vmem>>, vector<16x384xbf16>
    tpu.vector_store %arg6[%c48_42, %c0_43], %79 {strides = array<i32>} : memref<144x384xbf16, #tpu.memory_space<vmem>>, vector<16x384xbf16>,
    %81 = arith.truncf %68 : vector<16x384xf32> to vector<16x384xbf16>
    %c64_44 = arith.constant 64 : index
    %c0_45 = arith.constant 0 : index
    %82 = vector.load %arg6[%c64_44, %c0_45] : memref<144x384xbf16, #tpu.memory_space<vmem>>, vector<16x384xbf16>
    tpu.vector_store %arg6[%c64_44, %c0_45], %81 {strides = array<i32>} : memref<144x384xbf16, #tpu.memory_space<vmem>>, vector<16x384xbf16>,
    %c383_i32_46 = arith.constant 383 : i32
    %83 = tpu.dynamic_rotate %68 by %c383_i32_46 dim 1 : vector<16x384xf32>, i32 -> vector<16x384xf32>
    %84 = arith.truncf %83 : vector<16x384xf32> to vector<16x384xbf16>
    %c80_47 = arith.constant 80 : index
    %c0_48 = arith.constant 0 : index
    %85 = vector.load %arg6[%c80_47, %c0_48] : memref<144x384xbf16, #tpu.memory_space<vmem>>, vector<16x384xbf16>
    tpu.vector_store %arg6[%c80_47, %c0_48], %84 {strides = array<i32>} : memref<144x384xbf16, #tpu.memory_space<vmem>>, vector<16x384xbf16>,
    %c367_i32_49 = arith.constant 367 : i32
    %86 = tpu.dynamic_rotate %68 by %c367_i32_49 dim 1 : vector<16x384xf32>, i32 -> vector<16x384xf32>
    %87 = arith.truncf %86 : vector<16x384xf32> to vector<16x384xbf16>
    %c96_50 = arith.constant 96 : index
    %c0_51 = arith.constant 0 : index
    %88 = vector.load %arg6[%c96_50, %c0_51] : memref<144x384xbf16, #tpu.memory_space<vmem>>, vector<16x384xbf16>
    tpu.vector_store %arg6[%c96_50, %c0_51], %87 {strides = array<i32>} : memref<144x384xbf16, #tpu.memory_space<vmem>>, vector<16x384xbf16>,
    %c366_i32_52 = arith.constant 366 : i32
    %89 = tpu.dynamic_rotate %68 by %c366_i32_52 dim 1 : vector<16x384xf32>, i32 -> vector<16x384xf32>
    %90 = arith.truncf %89 : vector<16x384xf32> to vector<16x384xbf16>
    %c112_53 = arith.constant 112 : index
    %c0_54 = arith.constant 0 : index
    %91 = vector.load %arg6[%c112_53, %c0_54] : memref<144x384xbf16, #tpu.memory_space<vmem>>, vector<16x384xbf16>
    tpu.vector_store %arg6[%c112_53, %c0_54], %90 {strides = array<i32>} : memref<144x384xbf16, #tpu.memory_space<vmem>>, vector<16x384xbf16>,
    %c365_i32_55 = arith.constant 365 : i32
    %92 = tpu.dynamic_rotate %68 by %c365_i32_55 dim 1 : vector<16x384xf32>, i32 -> vector<16x384xf32>
    %93 = arith.truncf %92 : vector<16x384xf32> to vector<16x384xbf16>
    %c128_56 = arith.constant 128 : index
    %c0_57 = arith.constant 0 : index
    %94 = vector.load %arg6[%c128_56, %c0_57] : memref<144x384xbf16, #tpu.memory_space<vmem>>, vector<16x384xbf16>
    tpu.vector_store %arg6[%c128_56, %c0_57], %93 {strides = array<i32>} : memref<144x384xbf16, #tpu.memory_space<vmem>>, vector<16x384xbf16>,
    %c1 = arith.constant 1 : index
    %c0_58 = arith.constant 0 : index
    %c0_59 = arith.constant 0 : index
    %95 = vector.load %arg2[%c1, %c0_58, %c0_59] : memref<5x16x144xbf16, #tpu.memory_space<vmem>>, vector<1x16x144xbf16>
    %96 = vector.shape_cast %95 : vector<1x16x144xbf16> to vector<16x144xbf16>
    %c0_60 = arith.constant 0 : index
    %c0_61 = arith.constant 0 : index
    %97 = vector.load %arg6[%c0_60, %c0_61] : memref<144x384xbf16, #tpu.memory_space<vmem>>, vector<144x384xbf16>
    %cst_62 = arith.constant dense<0.000000e+00> : vector<16x384xf32>
    %98 = tpu.matmul %96, %97, %cst_62 {dimension_numbers = #tpu.dot_dimension_numbers<[1], [0], [0], [1], [0, 0, 1, 1], [], []>} : vector<16x144xbf16>, vector<144x384xbf16>, vector<16x384xf32> -> vector<16x384xf32>
    %c1_63 = arith.constant 1 : index
    %c0_64 = arith.constant 0 : index
    %c0_65 = arith.constant 0 : index
    %99 = vector.load %arg3[%c1_63, %c0_64, %c0_65] : memref<5x16x1xf32, #tpu.memory_space<vmem>>, vector<1x16x1xf32>
    %100 = vector.shape_cast %99 : vector<1x16x1xf32> to vector<16x1xf32>
    %101 = vector.broadcast %100 : vector<16x1xf32> to vector<16x384xf32>
    %102 = arith.mulf %98, %101 : vector<16x384xf32>
    %c1_66 = arith.constant 1 : index
    %c0_67 = arith.constant 0 : index
    %c0_68 = arith.constant 0 : index
    %103 = vector.load %arg4[%c1_66, %c0_67, %c0_68] : memref<5x16x1xf32, #tpu.memory_space<vmem>>, vector<1x16x1xf32>
    %104 = vector.shape_cast %103 : vector<1x16x1xf32> to vector<16x1xf32>
    %105 = vector.broadcast %104 : vector<16x1xf32> to vector<16x384xf32>
    %106 = arith.addf %102, %105 : vector<16x384xf32>
    %cst_69 = arith.constant 0.000000e+00 : f32
    %107 = vector.broadcast %cst_69 : f32 to vector<16x384xf32>
    %108 = arith.maximumf %106, %107 : vector<16x384xf32>
    %109 = vector.broadcast %24 : vector<1x384xf32> to vector<16x384xf32>
    %110 = arith.mulf %108, %109 : vector<16x384xf32>
    %c19_i32_70 = arith.constant 19 : i32
    %111 = tpu.dynamic_rotate %110 by %c19_i32_70 dim 1 : vector<16x384xf32>, i32 -> vector<16x384xf32>
    %112 = arith.truncf %111 : vector<16x384xf32> to vector<16x384xbf16>
    %c0_71 = arith.constant 0 : index
    %c0_72 = arith.constant 0 : index
    %113 = vector.load %arg6[%c0_71, %c0_72] : memref<144x384xbf16, #tpu.memory_space<vmem>>, vector<16x384xbf16>
    tpu.vector_store %arg6[%c0_71, %c0_72], %112 {strides = array<i32>} : memref<144x384xbf16, #tpu.memory_space<vmem>>, vector<16x384xbf16>,
    %c18_i32_73 = arith.constant 18 : i32
    %114 = tpu.dynamic_rotate %110 by %c18_i32_73 dim 1 : vector<16x384xf32>, i32 -> vector<16x384xf32>
    %115 = arith.truncf %114 : vector<16x384xf32> to vector<16x384xbf16>
    %c16_74 = arith.constant 16 : index
    %c0_75 = arith.constant 0 : index
    %116 = vector.load %arg6[%c16_74, %c0_75] : memref<144x384xbf16, #tpu.memory_space<vmem>>, vector<16x384xbf16>
    tpu.vector_store %arg6[%c16_74, %c0_75], %115 {strides = array<i32>} : memref<144x384xbf16, #tpu.memory_space<vmem>>, vector<16x384xbf16>,
    %c17_i32_76 = arith.constant 17 : i32
    %117 = tpu.dynamic_rotate %110 by %c17_i32_76 dim 1 : vector<16x384xf32>, i32 -> vector<16x384xf32>
    %118 = arith.truncf %117 : vector<16x384xf32> to vector<16x384xbf16>
    %c32_77 = arith.constant 32 : index
    %c0_78 = arith.constant 0 : index
    %119 = vector.load %arg6[%c32_77, %c0_78] : memref<144x384xbf16, #tpu.memory_space<vmem>>, vector<16x384xbf16>
    tpu.vector_store %arg6[%c32_77, %c0_78], %118 {strides = array<i32>} : memref<144x384xbf16, #tpu.memory_space<vmem>>, vector<16x384xbf16>,
    %c1_i32_79 = arith.constant 1 : i32
    %120 = tpu.dynamic_rotate %110 by %c1_i32_79 dim 1 : vector<16x384xf32>, i32 -> vector<16x384xf32>
    %121 = arith.truncf %120 : vector<16x384xf32> to vector<16x384xbf16>
    %c48_80 = arith.constant 48 : index
    %c0_81 = arith.constant 0 : index
    %122 = vector.load %arg6[%c48_80, %c0_81] : memref<144x384xbf16, #tpu.memory_space<vmem>>, vector<16x384xbf16>
    tpu.vector_store %arg6[%c48_80, %c0_81], %121 {strides = array<i32>} : memref<144x384xbf16, #tpu.memory_space<vmem>>, vector<16x384xbf16>,
    %123 = arith.truncf %110 : vector<16x384xf32> to vector<16x384xbf16>
    %c64_82 = arith.constant 64 : index
    %c0_83 = arith.constant 0 : index
    %124 = vector.load %arg6[%c64_82, %c0_83] : memref<144x384xbf16, #tpu.memory_space<vmem>>, vector<16x384xbf16>
    tpu.vector_store %arg6[%c64_82, %c0_83], %123 {strides = array<i32>} : memref<144x384xbf16, #tpu.memory_space<vmem>>, vector<16x384xbf16>,
    %c383_i32_84 = arith.constant 383 : i32
    %125 = tpu.dynamic_rotate %110 by %c383_i32_84 dim 1 : vector<16x384xf32>, i32 -> vector<16x384xf32>
    %126 = arith.truncf %125 : vector<16x384xf32> to vector<16x384xbf16>
    %c80_85 = arith.constant 80 : index
    %c0_86 = arith.constant 0 : index
    %127 = vector.load %arg6[%c80_85, %c0_86] : memref<144x384xbf16, #tpu.memory_space<vmem>>, vector<16x384xbf16>
    tpu.vector_store %arg6[%c80_85, %c0_86], %126 {strides = array<i32>} : memref<144x384xbf16, #tpu.memory_space<vmem>>, vector<16x384xbf16>,
    %c367_i32_87 = arith.constant 367 : i32
    %128 = tpu.dynamic_rotate %110 by %c367_i32_87 dim 1 : vector<16x384xf32>, i32 -> vector<16x384xf32>
    %129 = arith.truncf %128 : vector<16x384xf32> to vector<16x384xbf16>
    %c96_88 = arith.constant 96 : index
    %c0_89 = arith.constant 0 : index
    %130 = vector.load %arg6[%c96_88, %c0_89] : memref<144x384xbf16, #tpu.memory_space<vmem>>, vector<16x384xbf16>
    tpu.vector_store %arg6[%c96_88, %c0_89], %129 {strides = array<i32>} : memref<144x384xbf16, #tpu.memory_space<vmem>>, vector<16x384xbf16>,
    %c366_i32_90 = arith.constant 366 : i32
    %131 = tpu.dynamic_rotate %110 by %c366_i32_90 dim 1 : vector<16x384xf32>, i32 -> vector<16x384xf32>
    %132 = arith.truncf %131 : vector<16x384xf32> to vector<16x384xbf16>
    %c112_91 = arith.constant 112 : index
    %c0_92 = arith.constant 0 : index
    %133 = vector.load %arg6[%c112_91, %c0_92] : memref<144x384xbf16, #tpu.memory_space<vmem>>, vector<16x384xbf16>
    tpu.vector_store %arg6[%c112_91, %c0_92], %132 {strides = array<i32>} : memref<144x384xbf16, #tpu.memory_space<vmem>>, vector<16x384xbf16>,
    %c365_i32_93 = arith.constant 365 : i32
    %134 = tpu.dynamic_rotate %110 by %c365_i32_93 dim 1 : vector<16x384xf32>, i32 -> vector<16x384xf32>
    %135 = arith.truncf %134 : vector<16x384xf32> to vector<16x384xbf16>
    %c128_94 = arith.constant 128 : index
    %c0_95 = arith.constant 0 : index
    %136 = vector.load %arg6[%c128_94, %c0_95] : memref<144x384xbf16, #tpu.memory_space<vmem>>, vector<16x384xbf16>
    tpu.vector_store %arg6[%c128_94, %c0_95], %135 {strides = array<i32>} : memref<144x384xbf16, #tpu.memory_space<vmem>>, vector<16x384xbf16>,
    %c2 = arith.constant 2 : index
    %c0_96 = arith.constant 0 : index
    %c0_97 = arith.constant 0 : index
    %137 = vector.load %arg2[%c2, %c0_96, %c0_97] : memref<5x16x144xbf16, #tpu.memory_space<vmem>>, vector<1x16x144xbf16>
    %138 = vector.shape_cast %137 : vector<1x16x144xbf16> to vector<16x144xbf16>
    %c0_98 = arith.constant 0 : index
    %c0_99 = arith.constant 0 : index
    %139 = vector.load %arg6[%c0_98, %c0_99] : memref<144x384xbf16, #tpu.memory_space<vmem>>, vector<144x384xbf16>
    %cst_100 = arith.constant dense<0.000000e+00> : vector<16x384xf32>
    %140 = tpu.matmul %138, %139, %cst_100 {dimension_numbers = #tpu.dot_dimension_numbers<[1], [0], [0], [1], [0, 0, 1, 1], [], []>} : vector<16x144xbf16>, vector<144x384xbf16>, vector<16x384xf32> -> vector<16x384xf32>
    %c2_101 = arith.constant 2 : index
    %c0_102 = arith.constant 0 : index
    %c0_103 = arith.constant 0 : index
    %141 = vector.load %arg3[%c2_101, %c0_102, %c0_103] : memref<5x16x1xf32, #tpu.memory_space<vmem>>, vector<1x16x1xf32>
    %142 = vector.shape_cast %141 : vector<1x16x1xf32> to vector<16x1xf32>
    %143 = vector.broadcast %142 : vector<16x1xf32> to vector<16x384xf32>
    %144 = arith.mulf %140, %143 : vector<16x384xf32>
    %c2_104 = arith.constant 2 : index
    %c0_105 = arith.constant 0 : index
    %c0_106 = arith.constant 0 : index
    %145 = vector.load %arg4[%c2_104, %c0_105, %c0_106] : memref<5x16x1xf32, #tpu.memory_space<vmem>>, vector<1x16x1xf32>
    %146 = vector.shape_cast %145 : vector<1x16x1xf32> to vector<16x1xf32>
    %147 = vector.broadcast %146 : vector<16x1xf32> to vector<16x384xf32>
    %148 = arith.addf %144, %147 : vector<16x384xf32>
    %cst_107 = arith.constant 0.000000e+00 : f32
    %149 = vector.broadcast %cst_107 : f32 to vector<16x384xf32>
    %150 = arith.maximumf %148, %149 : vector<16x384xf32>
    %151 = arith.addf %150, %68 : vector<16x384xf32>
    %152 = vector.broadcast %24 : vector<1x384xf32> to vector<16x384xf32>
    %153 = arith.mulf %151, %152 : vector<16x384xf32>
    %c19_i32_108 = arith.constant 19 : i32
    %154 = tpu.dynamic_rotate %153 by %c19_i32_108 dim 1 : vector<16x384xf32>, i32 -> vector<16x384xf32>
    %155 = arith.truncf %154 : vector<16x384xf32> to vector<16x384xbf16>
    %c0_109 = arith.constant 0 : index
    %c0_110 = arith.constant 0 : index
    %156 = vector.load %arg6[%c0_109, %c0_110] : memref<144x384xbf16, #tpu.memory_space<vmem>>, vector<16x384xbf16>
    tpu.vector_store %arg6[%c0_109, %c0_110], %155 {strides = array<i32>} : memref<144x384xbf16, #tpu.memory_space<vmem>>, vector<16x384xbf16>,
    %c18_i32_111 = arith.constant 18 : i32
    %157 = tpu.dynamic_rotate %153 by %c18_i32_111 dim 1 : vector<16x384xf32>, i32 -> vector<16x384xf32>
    %158 = arith.truncf %157 : vector<16x384xf32> to vector<16x384xbf16>
    %c16_112 = arith.constant 16 : index
    %c0_113 = arith.constant 0 : index
    %159 = vector.load %arg6[%c16_112, %c0_113] : memref<144x384xbf16, #tpu.memory_space<vmem>>, vector<16x384xbf16>
    tpu.vector_store %arg6[%c16_112, %c0_113], %158 {strides = array<i32>} : memref<144x384xbf16, #tpu.memory_space<vmem>>, vector<16x384xbf16>,
    %c17_i32_114 = arith.constant 17 : i32
    %160 = tpu.dynamic_rotate %153 by %c17_i32_114 dim 1 : vector<16x384xf32>, i32 -> vector<16x384xf32>
    %161 = arith.truncf %160 : vector<16x384xf32> to vector<16x384xbf16>
    %c32_115 = arith.constant 32 : index
    %c0_116 = arith.constant 0 : index
    %162 = vector.load %arg6[%c32_115, %c0_116] : memref<144x384xbf16, #tpu.memory_space<vmem>>, vector<16x384xbf16>
    tpu.vector_store %arg6[%c32_115, %c0_116], %161 {strides = array<i32>} : memref<144x384xbf16, #tpu.memory_space<vmem>>, vector<16x384xbf16>,
    %c1_i32_117 = arith.constant 1 : i32
    %163 = tpu.dynamic_rotate %153 by %c1_i32_117 dim 1 : vector<16x384xf32>, i32 -> vector<16x384xf32>
    %164 = arith.truncf %163 : vector<16x384xf32> to vector<16x384xbf16>
    %c48_118 = arith.constant 48 : index
    %c0_119 = arith.constant 0 : index
    %165 = vector.load %arg6[%c48_118, %c0_119] : memref<144x384xbf16, #tpu.memory_space<vmem>>, vector<16x384xbf16>
    tpu.vector_store %arg6[%c48_118, %c0_119], %164 {strides = array<i32>} : memref<144x384xbf16, #tpu.memory_space<vmem>>, vector<16x384xbf16>,
    %166 = arith.truncf %153 : vector<16x384xf32> to vector<16x384xbf16>
    %c64_120 = arith.constant 64 : index
    %c0_121 = arith.constant 0 : index
    %167 = vector.load %arg6[%c64_120, %c0_121] : memref<144x384xbf16, #tpu.memory_space<vmem>>, vector<16x384xbf16>
    tpu.vector_store %arg6[%c64_120, %c0_121], %166 {strides = array<i32>} : memref<144x384xbf16, #tpu.memory_space<vmem>>, vector<16x384xbf16>,
    %c383_i32_122 = arith.constant 383 : i32
    %168 = tpu.dynamic_rotate %153 by %c383_i32_122 dim 1 : vector<16x384xf32>, i32 -> vector<16x384xf32>
    %169 = arith.truncf %168 : vector<16x384xf32> to vector<16x384xbf16>
    %c80_123 = arith.constant 80 : index
    %c0_124 = arith.constant 0 : index
    %170 = vector.load %arg6[%c80_123, %c0_124] : memref<144x384xbf16, #tpu.memory_space<vmem>>, vector<16x384xbf16>
    tpu.vector_store %arg6[%c80_123, %c0_124], %169 {strides = array<i32>} : memref<144x384xbf16, #tpu.memory_space<vmem>>, vector<16x384xbf16>,
    %c367_i32_125 = arith.constant 367 : i32
    %171 = tpu.dynamic_rotate %153 by %c367_i32_125 dim 1 : vector<16x384xf32>, i32 -> vector<16x384xf32>
    %172 = arith.truncf %171 : vector<16x384xf32> to vector<16x384xbf16>
    %c96_126 = arith.constant 96 : index
    %c0_127 = arith.constant 0 : index
    %173 = vector.load %arg6[%c96_126, %c0_127] : memref<144x384xbf16, #tpu.memory_space<vmem>>, vector<16x384xbf16>
    tpu.vector_store %arg6[%c96_126, %c0_127], %172 {strides = array<i32>} : memref<144x384xbf16, #tpu.memory_space<vmem>>, vector<16x384xbf16>,
    %c366_i32_128 = arith.constant 366 : i32
    %174 = tpu.dynamic_rotate %153 by %c366_i32_128 dim 1 : vector<16x384xf32>, i32 -> vector<16x384xf32>
    %175 = arith.truncf %174 : vector<16x384xf32> to vector<16x384xbf16>
    %c112_129 = arith.constant 112 : index
    %c0_130 = arith.constant 0 : index
    %176 = vector.load %arg6[%c112_129, %c0_130] : memref<144x384xbf16, #tpu.memory_space<vmem>>, vector<16x384xbf16>
    tpu.vector_store %arg6[%c112_129, %c0_130], %175 {strides = array<i32>} : memref<144x384xbf16, #tpu.memory_space<vmem>>, vector<16x384xbf16>,
    %c365_i32_131 = arith.constant 365 : i32
    %177 = tpu.dynamic_rotate %153 by %c365_i32_131 dim 1 : vector<16x384xf32>, i32 -> vector<16x384xf32>
    %178 = arith.truncf %177 : vector<16x384xf32> to vector<16x384xbf16>
    %c128_132 = arith.constant 128 : index
    %c0_133 = arith.constant 0 : index
    %179 = vector.load %arg6[%c128_132, %c0_133] : memref<144x384xbf16, #tpu.memory_space<vmem>>, vector<16x384xbf16>
    tpu.vector_store %arg6[%c128_132, %c0_133], %178 {strides = array<i32>} : memref<144x384xbf16, #tpu.memory_space<vmem>>, vector<16x384xbf16>,
    %c3 = arith.constant 3 : index
    %c0_134 = arith.constant 0 : index
    %c0_135 = arith.constant 0 : index
    %180 = vector.load %arg2[%c3, %c0_134, %c0_135] : memref<5x16x144xbf16, #tpu.memory_space<vmem>>, vector<1x16x144xbf16>
    %181 = vector.shape_cast %180 : vector<1x16x144xbf16> to vector<16x144xbf16>
    %c0_136 = arith.constant 0 : index
    %c0_137 = arith.constant 0 : index
    %182 = vector.load %arg6[%c0_136, %c0_137] : memref<144x384xbf16, #tpu.memory_space<vmem>>, vector<144x384xbf16>
    %cst_138 = arith.constant dense<0.000000e+00> : vector<16x384xf32>
    %183 = tpu.matmul %181, %182, %cst_138 {dimension_numbers = #tpu.dot_dimension_numbers<[1], [0], [0], [1], [0, 0, 1, 1], [], []>} : vector<16x144xbf16>, vector<144x384xbf16>, vector<16x384xf32> -> vector<16x384xf32>
    %c3_139 = arith.constant 3 : index
    %c0_140 = arith.constant 0 : index
    %c0_141 = arith.constant 0 : index
    %184 = vector.load %arg3[%c3_139, %c0_140, %c0_141] : memref<5x16x1xf32, #tpu.memory_space<vmem>>, vector<1x16x1xf32>
    %185 = vector.shape_cast %184 : vector<1x16x1xf32> to vector<16x1xf32>
    %186 = vector.broadcast %185 : vector<16x1xf32> to vector<16x384xf32>
    %187 = arith.mulf %183, %186 : vector<16x384xf32>
    %c3_142 = arith.constant 3 : index
    %c0_143 = arith.constant 0 : index
    %c0_144 = arith.constant 0 : index
    %188 = vector.load %arg4[%c3_142, %c0_143, %c0_144] : memref<5x16x1xf32, #tpu.memory_space<vmem>>, vector<1x16x1xf32>
    %189 = vector.shape_cast %188 : vector<1x16x1xf32> to vector<16x1xf32>
    %190 = vector.broadcast %189 : vector<16x1xf32> to vector<16x384xf32>
    %191 = arith.addf %187, %190 : vector<16x384xf32>
    %cst_145 = arith.constant 0.000000e+00 : f32
    %192 = vector.broadcast %cst_145 : f32 to vector<16x384xf32>
    %193 = arith.maximumf %191, %192 : vector<16x384xf32>
    %194 = vector.broadcast %24 : vector<1x384xf32> to vector<16x384xf32>
    %195 = arith.mulf %193, %194 : vector<16x384xf32>
    %c19_i32_146 = arith.constant 19 : i32
    %196 = tpu.dynamic_rotate %195 by %c19_i32_146 dim 1 : vector<16x384xf32>, i32 -> vector<16x384xf32>
    %197 = arith.truncf %196 : vector<16x384xf32> to vector<16x384xbf16>
    %c0_147 = arith.constant 0 : index
    %c0_148 = arith.constant 0 : index
    %198 = vector.load %arg6[%c0_147, %c0_148] : memref<144x384xbf16, #tpu.memory_space<vmem>>, vector<16x384xbf16>
    tpu.vector_store %arg6[%c0_147, %c0_148], %197 {strides = array<i32>} : memref<144x384xbf16, #tpu.memory_space<vmem>>, vector<16x384xbf16>,
    %c18_i32_149 = arith.constant 18 : i32
    %199 = tpu.dynamic_rotate %195 by %c18_i32_149 dim 1 : vector<16x384xf32>, i32 -> vector<16x384xf32>
    %200 = arith.truncf %199 : vector<16x384xf32> to vector<16x384xbf16>
    %c16_150 = arith.constant 16 : index
    %c0_151 = arith.constant 0 : index
    %201 = vector.load %arg6[%c16_150, %c0_151] : memref<144x384xbf16, #tpu.memory_space<vmem>>, vector<16x384xbf16>
    tpu.vector_store %arg6[%c16_150, %c0_151], %200 {strides = array<i32>} : memref<144x384xbf16, #tpu.memory_space<vmem>>, vector<16x384xbf16>,
    %c17_i32_152 = arith.constant 17 : i32
    %202 = tpu.dynamic_rotate %195 by %c17_i32_152 dim 1 : vector<16x384xf32>, i32 -> vector<16x384xf32>
    %203 = arith.truncf %202 : vector<16x384xf32> to vector<16x384xbf16>
    %c32_153 = arith.constant 32 : index
    %c0_154 = arith.constant 0 : index
    %204 = vector.load %arg6[%c32_153, %c0_154] : memref<144x384xbf16, #tpu.memory_space<vmem>>, vector<16x384xbf16>
    tpu.vector_store %arg6[%c32_153, %c0_154], %203 {strides = array<i32>} : memref<144x384xbf16, #tpu.memory_space<vmem>>, vector<16x384xbf16>,
    %c1_i32_155 = arith.constant 1 : i32
    %205 = tpu.dynamic_rotate %195 by %c1_i32_155 dim 1 : vector<16x384xf32>, i32 -> vector<16x384xf32>
    %206 = arith.truncf %205 : vector<16x384xf32> to vector<16x384xbf16>
    %c48_156 = arith.constant 48 : index
    %c0_157 = arith.constant 0 : index
    %207 = vector.load %arg6[%c48_156, %c0_157] : memref<144x384xbf16, #tpu.memory_space<vmem>>, vector<16x384xbf16>
    tpu.vector_store %arg6[%c48_156, %c0_157], %206 {strides = array<i32>} : memref<144x384xbf16, #tpu.memory_space<vmem>>, vector<16x384xbf16>,
    %208 = arith.truncf %195 : vector<16x384xf32> to vector<16x384xbf16>
    %c64_158 = arith.constant 64 : index
    %c0_159 = arith.constant 0 : index
    %209 = vector.load %arg6[%c64_158, %c0_159] : memref<144x384xbf16, #tpu.memory_space<vmem>>, vector<16x384xbf16>
    tpu.vector_store %arg6[%c64_158, %c0_159], %208 {strides = array<i32>} : memref<144x384xbf16, #tpu.memory_space<vmem>>, vector<16x384xbf16>,
    %c383_i32_160 = arith.constant 383 : i32
    %210 = tpu.dynamic_rotate %195 by %c383_i32_160 dim 1 : vector<16x384xf32>, i32 -> vector<16x384xf32>
    %211 = arith.truncf %210 : vector<16x384xf32> to vector<16x384xbf16>
    %c80_161 = arith.constant 80 : index
    %c0_162 = arith.constant 0 : index
    %212 = vector.load %arg6[%c80_161, %c0_162] : memref<144x384xbf16, #tpu.memory_space<vmem>>, vector<16x384xbf16>
    tpu.vector_store %arg6[%c80_161, %c0_162], %211 {strides = array<i32>} : memref<144x384xbf16, #tpu.memory_space<vmem>>, vector<16x384xbf16>,
    %c367_i32_163 = arith.constant 367 : i32
    %213 = tpu.dynamic_rotate %195 by %c367_i32_163 dim 1 : vector<16x384xf32>, i32 -> vector<16x384xf32>
    %214 = arith.truncf %213 : vector<16x384xf32> to vector<16x384xbf16>
    %c96_164 = arith.constant 96 : index
    %c0_165 = arith.constant 0 : index
    %215 = vector.load %arg6[%c96_164, %c0_165] : memref<144x384xbf16, #tpu.memory_space<vmem>>, vector<16x384xbf16>
    tpu.vector_store %arg6[%c96_164, %c0_165], %214 {strides = array<i32>} : memref<144x384xbf16, #tpu.memory_space<vmem>>, vector<16x384xbf16>,
    %c366_i32_166 = arith.constant 366 : i32
    %216 = tpu.dynamic_rotate %195 by %c366_i32_166 dim 1 : vector<16x384xf32>, i32 -> vector<16x384xf32>
    %217 = arith.truncf %216 : vector<16x384xf32> to vector<16x384xbf16>
    %c112_167 = arith.constant 112 : index
    %c0_168 = arith.constant 0 : index
    %218 = vector.load %arg6[%c112_167, %c0_168] : memref<144x384xbf16, #tpu.memory_space<vmem>>, vector<16x384xbf16>
    tpu.vector_store %arg6[%c112_167, %c0_168], %217 {strides = array<i32>} : memref<144x384xbf16, #tpu.memory_space<vmem>>, vector<16x384xbf16>,
    %c365_i32_169 = arith.constant 365 : i32
    %219 = tpu.dynamic_rotate %195 by %c365_i32_169 dim 1 : vector<16x384xf32>, i32 -> vector<16x384xf32>
    %220 = arith.truncf %219 : vector<16x384xf32> to vector<16x384xbf16>
    %c128_170 = arith.constant 128 : index
    %c0_171 = arith.constant 0 : index
    %221 = vector.load %arg6[%c128_170, %c0_171] : memref<144x384xbf16, #tpu.memory_space<vmem>>, vector<16x384xbf16>
    tpu.vector_store %arg6[%c128_170, %c0_171], %220 {strides = array<i32>} : memref<144x384xbf16, #tpu.memory_space<vmem>>, vector<16x384xbf16>,
    %c4 = arith.constant 4 : index
    %c0_172 = arith.constant 0 : index
    %c0_173 = arith.constant 0 : index
    %222 = vector.load %arg2[%c4, %c0_172, %c0_173] : memref<5x16x144xbf16, #tpu.memory_space<vmem>>, vector<1x16x144xbf16>
    %223 = vector.shape_cast %222 : vector<1x16x144xbf16> to vector<16x144xbf16>
    %c0_174 = arith.constant 0 : index
    %c0_175 = arith.constant 0 : index
    %224 = vector.load %arg6[%c0_174, %c0_175] : memref<144x384xbf16, #tpu.memory_space<vmem>>, vector<144x384xbf16>
    %cst_176 = arith.constant dense<0.000000e+00> : vector<16x384xf32>
    %225 = tpu.matmul %223, %224, %cst_176 {dimension_numbers = #tpu.dot_dimension_numbers<[1], [0], [0], [1], [0, 0, 1, 1], [], []>} : vector<16x144xbf16>, vector<144x384xbf16>, vector<16x384xf32> -> vector<16x384xf32>
    %c4_177 = arith.constant 4 : index
    %c0_178 = arith.constant 0 : index
    %c0_179 = arith.constant 0 : index
    %226 = vector.load %arg3[%c4_177, %c0_178, %c0_179] : memref<5x16x1xf32, #tpu.memory_space<vmem>>, vector<1x16x1xf32>
    %227 = vector.shape_cast %226 : vector<1x16x1xf32> to vector<16x1xf32>
    %228 = vector.broadcast %227 : vector<16x1xf32> to vector<16x384xf32>
    %229 = arith.mulf %225, %228 : vector<16x384xf32>
    %c4_180 = arith.constant 4 : index
    %c0_181 = arith.constant 0 : index
    %c0_182 = arith.constant 0 : index
    %230 = vector.load %arg4[%c4_180, %c0_181, %c0_182] : memref<5x16x1xf32, #tpu.memory_space<vmem>>, vector<1x16x1xf32>
    %231 = vector.shape_cast %230 : vector<1x16x1xf32> to vector<16x1xf32>
    %232 = vector.broadcast %231 : vector<16x1xf32> to vector<16x384xf32>
    %233 = arith.addf %229, %232 : vector<16x384xf32>
    %cst_183 = arith.constant 0.000000e+00 : f32
    %234 = vector.broadcast %cst_183 : f32 to vector<16x384xf32>
    %235 = arith.maximumf %233, %234 : vector<16x384xf32>
    %236 = arith.addf %235, %153 : vector<16x384xf32>
    %237 = vector.broadcast %24 : vector<1x384xf32> to vector<16x384xf32>
    %238 = arith.mulf %236, %237 : vector<16x384xf32>
    %239 = vector.extract_strided_slice %238 {offsets = [0, 18], sizes = [16, 288], strides = [1, 1]} : vector<16x384xf32> to vector<16x288xf32>
    %c0_184 = arith.constant 0 : index
    %c0_185 = arith.constant 0 : index
    %c0_186 = arith.constant 0 : index
    %240 = vector.load %arg5[%c0_184, %c0_185, %c0_186] : memref<1x16x288xf32, #tpu.memory_space<vmem>>, vector<1x16x288xf32>
    %241 = vector.shape_cast %240 : vector<1x16x288xf32> to vector<16x288xf32>
    %242 = vector.shape_cast %239 : vector<16x288xf32> to vector<1x16x288xf32>
    tpu.vector_store %arg5[%c0_184, %c0_185, %c0_186], %242 {strides = array<i32>} : memref<1x16x288xf32, #tpu.memory_space<vmem>>, vector<1x16x288xf32>,
    return
  }
  func.func @transform_0(%arg0: i32) -> (i32, i32, i32) {
    %c0_i32 = arith.constant 0 : i32
    %c0_i32_0 = arith.constant 0 : i32
    %c0_i32_1 = arith.constant 0 : i32
    return %arg0, %c0_i32, %c0_i32_0 : i32, i32, i32
  }
  func.func @transform_1(%arg0: i32) -> (i32, i32, i32) {
    %c0_i32 = arith.constant 0 : i32
    %c0_i32_0 = arith.constant 0 : i32
    %c0_i32_1 = arith.constant 0 : i32
    %c0_i32_2 = arith.constant 0 : i32
    return %c0_i32, %c0_i32_0, %c0_i32_1 : i32, i32, i32
  }
  func.func @transform_2(%arg0: i32) -> (i32, i32, i32) {
    %c0_i32 = arith.constant 0 : i32
    %c0_i32_0 = arith.constant 0 : i32
    %c0_i32_1 = arith.constant 0 : i32
    %c0_i32_2 = arith.constant 0 : i32
    return %c0_i32, %c0_i32_0, %c0_i32_1 : i32, i32, i32
  }
  func.func @transform_3(%arg0: i32) -> (i32, i32, i32) {
    %c0_i32 = arith.constant 0 : i32
    %c0_i32_0 = arith.constant 0 : i32
    %c0_i32_1 = arith.constant 0 : i32
    %c0_i32_2 = arith.constant 0 : i32
    return %c0_i32, %c0_i32_0, %c0_i32_1 : i32, i32, i32
  }
  func.func @transform_4(%arg0: i32) -> (i32, i32, i32) {
    %c0_i32 = arith.constant 0 : i32
    %c0_i32_0 = arith.constant 0 : i32
    %c0_i32_1 = arith.constant 0 : i32
    return %arg0, %c0_i32, %c0_i32_0 : i32, i32, i32
  }
}

</mosaic_0001>

<llo_original>
// kernel: residual_module_forward.1
$region0: #{residual_module_forward.1}
  #allocation0 [shape = 'u32[]', space=smem, size = 0x4, offset = 0x4, fixed_abs, tag = 'smem constant byte address 0x4 - core index']
  #allocation1 [shape = 'u32[144,128]{1,0:T(1,128)}', space=vmem, size = 0x12000, scoped, tag = 'internal scratch']
  #allocation2 [shape = 'bf16[144,384]{1,0:T(16,128)(2,1)}', space=vmem, size = 0x1b000, scoped, tag = 'scratch operand']
  %s0 = inlined_call_operand.vmem [shape: f32[2,16,384], index: 0, kind: input, shape index: {}]
  %s1 = inlined_call_operand.vmem [shape: bf16[5,16,144], index: 1, kind: input, shape index: {}]
  %s2 = inlined_call_operand.vmem [shape: f32[5,16,1], index: 2, kind: input, shape index: {}]
  %s3 = inlined_call_operand.vmem [shape: f32[5,16,1], index: 3, kind: input, shape index: {}]
  %s4 = inlined_call_operand.vmem [shape: f32[2,16,288], index: 4, kind: output, shape index: {}]
  %s5 = sld [smem:[#allocation0]]
  $region49: #{residual_module_forward.1} parent=0
    _
  %s7 = ssub.s32 1, %s5
  %s8 = scalar_select 0, %s7, %s5
  loop: start=0, step=1, limit=4
  $region2: #{residual_module_forward.1} parent=0 // loop_pre_header
    _
  $region3: #{residual_module_forward.1} parent=0 // loop_header
    %s10 = sphi 0, %s14
    %p11 = scmp.ge.s32.totalorder %s10, 4
    %s20 = sphi 0, %s22
    %s23 = sphi 0, %s20
    %s24 = sphi 0, %s23
    %s40 = sphi 0, %s24
    %s44 = sphi 0, %s44
    %s46 = sphi 0, %s44
    %s47 = sphi 0, %s46
    %s61 = sphi 0, %s47
    %s65 = sphi 0, %s65
    %s67 = sphi 0, %s65
    %s68 = sphi 0, %s67
    %s82 = sphi 0, %s68
    %s86 = sphi 0, %s86
    %s88 = sphi 0, %s86
    %s89 = sphi 0, %s88
    %s103 = sphi 0, %s89
    %s109 = sphi 0, %s111
    %s112 = sphi 0, %s109
    %s113 = sphi 0, %s112
    %s129 = sphi 0, %s113
  $region4: #{residual_module_forward.1} parent=0 // loop_header_branch
    %13 = sbr.rel (%p11) target = $region8
  $region5: #{residual_module_forward.1} parent=0 // loop_body
    %s15 = ssub.s32 %s10, 1
    %s16 = ssub.s32 %s10, 2
    %s17 = sadd.s32 %s10, 1
    %s18 = ssub.s32 %s10, %s17
    %p19 = scmp.eq.s32.totalorder %s18, 0
    %s21 = sadd.s32 %s20, 1
    %s22 = scalar_select %p19, %s20, %s21
    %p25 = pneg %p19
    %p26 = scmp.eq.s32.totalorder %s10, 1
    %p27 = por %p25, %p26
    %p28 = scmp.ne.s32.totalorder %s20, %s23
    %p29 = scmp.eq.s32.totalorder %s10, 0
    %p30 = por %p28, %p29
    %p31 = scmp.ne.s32.totalorder %s20, %s23
    %p32 = scmp.eq.s32.totalorder %s15, 1
    %p33 = por %p31, %p32
    %p34 = scmp.ne.s32.totalorder %s23, %s24
    %p35 = scmp.eq.s32.totalorder %s15, 0
    %p36 = por %p34, %p35
    %p37 = scmp.ne.s32.totalorder %s23, %s24
    %p38 = scmp.eq.s32.totalorder %s16, 1
    %p39 = por %p37, %p38
    %p41 = scmp.ne.s32.totalorder %s24, %s40
    %p42 = scmp.eq.s32.totalorder %s16, 0
    %p43 = por %p41, %p42
    %s45 = sadd.s32 %s44, 1
    %p48 = scmp.eq.s32.totalorder %s10, 1
    %p49 = scmp.ne.s32.totalorder %s44, %s46
    %p50 = scmp.eq.s32.totalorder %s10, 0
    %p51 = por %p49, %p50
    %p52 = scmp.ne.s32.totalorder %s44, %s46
    %p53 = scmp.eq.s32.totalorder %s15, 1
    %p54 = por %p52, %p53
    %p55 = scmp.ne.s32.totalorder %s46, %s47
    %p56 = scmp.eq.s32.totalorder %s15, 0
    %p57 = por %p55, %p56
    %p58 = scmp.ne.s32.totalorder %s46, %s47
    %p59 = scmp.eq.s32.totalorder %s16, 1
    %p60 = por %p58, %p59
    %p62 = scmp.ne.s32.totalorder %s47, %s61
    %p63 = scmp.eq.s32.totalorder %s16, 0
    %p64 = por %p62, %p63
    %s66 = sadd.s32 %s65, 1
    %p69 = scmp.eq.s32.totalorder %s10, 1
    %p70 = scmp.ne.s32.totalorder %s65, %s67
    %p71 = scmp.eq.s32.totalorder %s10, 0
    %p72 = por %p70, %p71
    %p73 = scmp.ne.s32.totalorder %s65, %s67
    %p74 = scmp.eq.s32.totalorder %s15, 1
    %p75 = por %p73, %p74
    %p76 = scmp.ne.s32.totalorder %s67, %s68
    %p77 = scmp.eq.s32.totalorder %s15, 0
    %p78 = por %p76, %p77
    %p79 = scmp.ne.s32.totalorder %s67, %s68
    %p80 = scmp.eq.s32.totalorder %s16, 1
    %p81 = por %p79, %p80
    %p83 = scmp.ne.s32.totalorder %s68, %s82
    %p84 = scmp.eq.s32.totalorder %s16, 0
    %p85 = por %p83, %p84
    %s87 = sadd.s32 %s86, 1
    %p90 = scmp.eq.s32.totalorder %s10, 1
    %p91 = scmp.ne.s32.totalorder %s86, %s88
    %p92 = scmp.eq.s32.totalorder %s10, 0
    %p93 = por %p91, %p92
    %p94 = scmp.ne.s32.totalorder %s86, %s88
    %p95 = scmp.eq.s32.totalorder %s15, 1
    %p96 = por %p94, %p95
    %p97 = scmp.ne.s32.totalorder %s88, %s89
    %p98 = scmp.eq.s32.totalorder %s15, 0
    %p99 = por %p97, %p98
    %p100 = scmp.ne.s32.totalorder %s88, %s89
    %p101 = scmp.eq.s32.totalorder %s16, 1
    %p102 = por %p100, %p101
    %p104 = scmp.ne.s32.totalorder %s89, %s103
    %p105 = scmp.eq.s32.totalorder %s16, 0
    %p106 = por %p104, %p105
    %s107 = ssub.s32 %s10, %s17
    %p108 = scmp.eq.s32.totalorder %s107, 0
    %s110 = sadd.s32 %s109, 1
    %s111 = scalar_select %p108, %s109, %s110
    %p114 = pneg %p108
    %p115 = scmp.eq.s32.totalorder %s10, 1
    %p116 = por %p114, %p115
    %p117 = scmp.ne.s32.totalorder %s109, %s112
    %p118 = scmp.eq.s32.totalorder %s10, 0
    %p119 = por %p117, %p118
    %p120 = scmp.ne.s32.totalorder %s109, %s112
    %p121 = scmp.eq.s32.totalorder %s15, 1
    %p122 = por %p120, %p121
    %p123 = scmp.ne.s32.totalorder %s112, %s113
    %p124 = scmp.eq.s32.totalorder %s15, 0
    %p125 = por %p123, %p124
    %p126 = scmp.ne.s32.totalorder %s112, %s113
    %p127 = scmp.eq.s32.totalorder %s16, 1
    %p128 = por %p126, %p127
    %p130 = scmp.ne.s32.totalorder %s113, %s129
    %p131 = scmp.eq.s32.totalorder %s16, 0
    %p132 = por %p130, %p131
    %p133 = scmp.le.s32.totalorder 1, %s10
    %p134 = scmp.lt.s32.totalorder %s10, 3
    %p135 = pnand %p133, %p134
    %p136 = pneg %p135
    // Predicated region
    $region9: #{residual_module_forward.1} parent=5 // pred_check
      _
    $region10: #{residual_module_forward.1} parent=5 // pred_check_branch
      %138 = sbr.rel (%p135) target = $region12
    $region11: #{residual_module_forward.1} parent=5 // pred_region
      %s139 = ssub.s32 %s10, 1
      // Predicated region
      $region13: #{residual_module_forward.1} parent=11 // pred_check
        %p140 = pneg %p57
      $region14: #{residual_module_forward.1} parent=11 // pred_check_branch
        %142 = sbr.rel (%p140) target = $region16
      $region15: #{residual_module_forward.1} parent=11 // pred_region
        _
      $region16: #{residual_module_forward.1} parent=11 // pred_fallthru
        _
      // Predicated region
      $region17: #{residual_module_forward.1} parent=11 // pred_check
        %p143 = pneg %p78
      $region18: #{residual_module_forward.1} parent=11 // pred_check_branch
        %145 = sbr.rel (%p143) target = $region20
      $region19: #{residual_module_forward.1} parent=11 // pred_region
        _
      $region20: #{residual_module_forward.1} parent=11 // pred_fallthru
        _
      // Predicated region
      $region21: #{residual_module_forward.1} parent=11 // pred_check
        %p146 = pneg %p99
      $region22: #{residual_module_forward.1} parent=11 // pred_check_branch
        %148 = sbr.rel (%p146) target = $region24
      $region23: #{residual_module_forward.1} parent=11 // pred_region
        _
      $region24: #{residual_module_forward.1} parent=11 // pred_fallthru
        _
    $region12: #{residual_module_forward.1} parent=5 // pred_fallthru
      _
    %p149 = scmp.lt.s32.totalorder %s10, 2
    // Predicated region
    $region25: #{residual_module_forward.1} parent=5 // pred_check
      %p150 = pneg %p149
    $region26: #{residual_module_forward.1} parent=5 // pred_check_branch
      %152 = sbr.rel (%p150) target = $region28
    $region27: #{residual_module_forward.1} parent=5 // pred_region
      // Predicated region
      $region29: #{residual_module_forward.1} parent=27 // pred_check
        %p153 = pneg %p30
      $region30: #{residual_module_forward.1} parent=27 // pred_check_branch
        %155 = sbr.rel (%p153) target = $region32
      $region31: #{residual_module_forward.1} parent=27 // pred_region
        %p156 = scmp.lt.s32.totalorder %s10, 1
        %s157 = scalar_select %p156, %s10, 1
        %s158 = smul.addr %s157, 6
        %s159 = smul.addr %s158, 8
        %s160 = scalar_lea.vmem %s0, %s159
      $region32: #{residual_module_forward.1} parent=27 // pred_fallthru
        _
    $region28: #{residual_module_forward.1} parent=5 // pred_fallthru
      _
    %p161 = scmp.le.s32.totalorder 1, %s10
    %p162 = scmp.lt.s32.totalorder %s10, 3
    %p163 = pnand %p161, %p162
    %p164 = pneg %p163
    // Predicated region
    $region33: #{residual_module_forward.1} parent=5 // pred_check
      _
    $region34: #{residual_module_forward.1} parent=5 // pred_check_branch
      %166 = sbr.rel (%p163) target = $region36
    $region35: #{residual_module_forward.1} parent=5 // pred_region
      %s167 = ssub.s32 %s10, 1
      %p168 = scmp.lt.s32.totalorder %s15, 1
      %s169 = scalar_select %p168, %s15, 1
      %s170 = smul.addr %s169, 6
      %s171 = smul.addr %s170, 8
      %s172 = scalar_lea.vmem %s0, %s171
      %p173 = pneg %p36
      %p174 = pneg %p33
      %p175 = pneg %p57
      %p176 = pneg %p54
      %p177 = pneg %p78
      %p178 = pneg %p75
      %p179 = pneg %p99
      %p180 = pneg %p96
      %p181 = pneg %p125
      %p182 = pneg %p122
      %p183 = scmp.lt.s32.totalorder %s15, 1
      %s184 = scalar_select %p183, %s15, 1
      %s185 = smul.addr %s184, 6
      %s186 = smul.addr %s185, 8
      %s187 = scalar_lea.vmem %s4, %s186
      %p188 = scmp.lt.s32.totalorder %s15, 1
      %s189 = scalar_select %p188, %s15, 1
      %s190 = smul.addr %s189, 6
      %s191 = smul.addr %s190, 8
      %s192 = scalar_lea.vmem %s0, %s191
      %p193 = scmp.lt.s32.totalorder %s15, 1
      %s194 = scalar_select %p193, %s15, 1
      %s195 = smul.addr %s194, 6
      %s196 = smul.addr %s195, 8
      %s197 = scalar_lea.vmem %s4, %s196
      %v199 = vlaneseq
      %v200 = vand.u32 %v199, 127
      %v201 = vadd.s32 %v200, 128
      %v202 = vadd.s32 %v200, 256
      %v203 = vcvt.s32.f32 %v200
      %v204 = vcvt.s32.f32 %v201
      %v205 = vcvt.s32.f32 %v202
      %v206 = vadd.f32 %v203, 0.5
      %v207 = vadd.f32 %v204, 0.5
      %v208 = vadd.f32 %v205, 0.5
      %v209 = vmul.f32 %v206, 0.055555556
      %v210 = vmul.f32 %v207, 0.055555556
      %v211 = vmul.f32 %v208, 0.055555556
      %v212 = vfloor.f32 %v209
      %v213 = vfloor.f32 %v210
      %v214 = vfloor.f32 %v211
      %v215 = vcvt.f32.s32.to.zero.pseudo %v212
      %v216 = vcvt.f32.s32.to.zero.pseudo %v213
      %v217 = vcvt.f32.s32.to.zero.pseudo %v214
      %v218 = vmul.u32 %v215, 18
      %v219 = vmul.u32 %v216, 18
      %v220 = vmul.u32 %v217, 18
      %v221 = vsub.s32 %v200, %v218
      %v222 = vsub.s32 %v201, %v219
      %v223 = vsub.s32 %v202, %v220
      %vm224 = vcmp.ge.s32.totalorder %v215, 1
      %vm225 = vcmp.ge.s32.totalorder %v216, 1
      %vm226 = vcmp.ge.s32.totalorder %v217, 1
      %vm227 = vcmp.le.s32.totalorder %v215, 16
      %vm228 = vcmp.le.s32.totalorder %v216, 16
      %vm229 = vcmp.le.s32.totalorder %v217, 16
      %vm230 = vmand %vm224, %vm227
      %vm231 = vmand %vm225, %vm228
      %vm232 = vmand %vm226, %vm229
      %vm233 = vcmp.ge.s32.totalorder %v221, 1
      %vm234 = vcmp.ge.s32.totalorder %v222, 1
      %vm235 = vcmp.ge.s32.totalorder %v223, 1
      %vm236 = vmand %vm230, %vm233
      %vm237 = vmand %vm231, %vm234
      %vm238 = vmand %vm232, %vm235
      %vm239 = vcmp.le.s32.totalorder %v221, 16
      %vm240 = vcmp.le.s32.totalorder %v222, 16
      %vm241 = vcmp.le.s32.totalorder %v223, 16
      %vm242 = vmand %vm236, %vm239
      %vm243 = vmand %vm237, %vm240
      %vm244 = vmand %vm238, %vm241
      %v245 = vsel %vm242, 1.0, 0.0
      %v246 = vsel %vm243, 1.0, 0.0
      %v247 = vsel %vm244, 1.0, 0.0
      %v248 = vld [vmem:[%s192] sm:$0xff]
      %v249 = vld [vmem:[%s192 + $0x8] sm:$0xff]
      %v250 = vld [vmem:[%s192 + $0x10] sm:$0xff]
      %v251 = vld [vmem:[%s192 + $0x18] sm:$0xff]
      %v252 = vld [vmem:[%s192 + $0x20] sm:$0xff]
      %v253 = vld [vmem:[%s192 + $0x28] sm:$0xff]
      %254 = vrot.lane.b32.xlu0 %v248, 19
      %v255 = vpop.permute.xlu0 %254
      %256 = vrot.lane.b32.xlu0 %v251, 19
      %v257 = vpop.permute.xlu0 %256
      %258 = vrot.lane.b32.xlu0 %v249, 19
      %v259 = vpop.permute.xlu0 %258
      %260 = vrot.lane.b32.xlu0 %v252, 19
      %v261 = vpop.permute.xlu0 %260
      %262 = vrot.lane.b32.xlu0 %v250, 19
      %v263 = vpop.permute.xlu0 %262
      %264 = vrot.lane.b32.xlu0 %v253, 19
      %v265 = vpop.permute.xlu0 %264
      %vm266 = vcmp.lt.s32.totalorder %v200, 19
      %v267 = vsel %vm266, %v259, %v263
      %v268 = vsel %vm266, %v261, %v265
      %v269 = vsel %vm266, %v255, %v259
      %v270 = vsel %vm266, %v257, %v261
      %v271 = vsel %vm266, %v263, %v255
      %v272 = vsel %vm266, %v265, %v257
      %v273 = vpack.c.bf16 %v272, %v271
      %v274 = vpack.c.bf16 %v270, %v269
      %v275 = vpack.c.bf16 %v268, %v267
      %276 = vst [vmem:[#allocation2] sm:$0xff] %v273
      %277 = vst [vmem:[#allocation2 + $0x8] sm:$0xff] %v274
      %278 = vst [vmem:[#allocation2 + $0x10] sm:$0xff] %v275
      %279 = vrot.lane.b32.xlu0 %v248, 18
      %v280 = vpop.permute.xlu0 %279
      %281 = vrot.lane.b32.xlu0 %v251, 18
      %v282 = vpop.permute.xlu0 %281
      %283 = vrot.lane.b32.xlu0 %v249, 18
      %v284 = vpop.permute.xlu0 %283
      %285 = vrot.lane.b32.xlu0 %v252, 18
      %v286 = vpop.permute.xlu0 %285
      %287 = vrot.lane.b32.xlu0 %v250, 18
      %v288 = vpop.permute.xlu0 %287
      %289 = vrot.lane.b32.xlu0 %v253, 18
      %v290 = vpop.permute.xlu0 %289
      %vm291 = vcmp.lt.s32.totalorder %v200, 18
      %v292 = vsel %vm291, %v284, %v288
      %v293 = vsel %vm291, %v286, %v290
      %v294 = vsel %vm291, %v280, %v284
      %v295 = vsel %vm291, %v282, %v286
      %v296 = vsel %vm291, %v288, %v280
      %v297 = vsel %vm291, %v290, %v282
      %v298 = vpack.c.bf16 %v297, %v296
      %v299 = vpack.c.bf16 %v295, %v294
      %v300 = vpack.c.bf16 %v293, %v292
      %301 = vst [vmem:[#allocation2 + $0x18] sm:$0xff] %v298
      %302 = vst [vmem:[#allocation2 + $0x20] sm:$0xff] %v299
      %303 = vst [vmem:[#allocation2 + $0x28] sm:$0xff] %v300
      %304 = vrot.lane.b32.xlu0 %v248, 17
      %v305 = vpop.permute.xlu0 %304
      %306 = vrot.lane.b32.xlu0 %v251, 17
      %v307 = vpop.permute.xlu0 %306
      %308 = vrot.lane.b32.xlu0 %v249, 17
      %v309 = vpop.permute.xlu0 %308
      %310 = vrot.lane.b32.xlu0 %v252, 17
      %v311 = vpop.permute.xlu0 %310
      %312 = vrot.lane.b32.xlu0 %v250, 17
      %v313 = vpop.permute.xlu0 %312
      %314 = vrot.lane.b32.xlu0 %v253, 17
      %v315 = vpop.permute.xlu0 %314
      %vm316 = vcmp.lt.s32.totalorder %v200, 17
      %v317 = vsel %vm316, %v309, %v313
      %v318 = vsel %vm316, %v311, %v315
      %v319 = vsel %vm316, %v305, %v309
      %v320 = vsel %vm316, %v307, %v311
      %v321 = vsel %vm316, %v313, %v305
      %v322 = vsel %vm316, %v315, %v307
      %v323 = vpack.c.bf16 %v322, %v321
      %v324 = vpack.c.bf16 %v320, %v319
      %v325 = vpack.c.bf16 %v318, %v317
      %326 = vst [vmem:[#allocation2 + $0x30] sm:$0xff] %v323
      %327 = vst [vmem:[#allocation2 + $0x38] sm:$0xff] %v324
      %328 = vst [vmem:[#allocation2 + $0x40] sm:$0xff] %v325
      %329 = vrot.lane.b32.xlu0 %v248, 1
      %v330 = vpop.permute.xlu0 %329
      %331 = vrot.lane.b32.xlu0 %v251, 1
      %v332 = vpop.permute.xlu0 %331
      %333 = vrot.lane.b32.xlu0 %v249, 1
      %v334 = vpop.permute.xlu0 %333
      %335 = vrot.lane.b32.xlu0 %v252, 1
      %v336 = vpop.permute.xlu0 %335
      %337 = vrot.lane.b32.xlu0 %v250, 1
      %v338 = vpop.permute.xlu0 %337
      %339 = vrot.lane.b32.xlu0 %v253, 1
      %v340 = vpop.permute.xlu0 %339
      %vm341 = vcmp.lt.s32.totalorder %v200, 1
      %v342 = vsel %vm341, %v334, %v338
      %v343 = vsel %vm341, %v336, %v340
      %v344 = vsel %vm341, %v330, %v334
      %v345 = vsel %vm341, %v332, %v336
      %v346 = vsel %vm341, %v338, %v330
      %v347 = vsel %vm341, %v340, %v332
      %v348 = vpack.c.bf16 %v347, %v346
      %v349 = vpack.c.bf16 %v345, %v344
      %v350 = vpack.c.bf16 %v343, %v342
      %351 = vst [vmem:[#allocation2 + $0x48] sm:$0xff] %v348
      %352 = vst [vmem:[#allocation2 + $0x50] sm:$0xff] %v349
      %353 = vst [vmem:[#allocation2 + $0x58] sm:$0xff] %v350
      %v354 = vpack.c.bf16 %v251, %v248
      %v355 = vpack.c.bf16 %v252, %v249
      %v356 = vpack.c.bf16 %v253, %v250
      %357 = vst [vmem:[#allocation2 + $0x60] sm:$0xff] %v354
      %358 = vst [vmem:[#allocation2 + $0x68] sm:$0xff] %v355
      %359 = vst [vmem:[#allocation2 + $0x70] sm:$0xff] %v356
      %360 = vrot.lane.b32.xlu0 %v248, 127
      %v361 = vpop.permute.xlu0 %360
      %362 = vrot.lane.b32.xlu0 %v251, 127
      %v363 = vpop.permute.xlu0 %362
      %364 = vrot.lane.b32.xlu0 %v249, 127
      %v365 = vpop.permute.xlu0 %364
      %366 = vrot.lane.b32.xlu0 %v252, 127
      %v367 = vpop.permute.xlu0 %366
      %368 = vrot.lane.b32.xlu0 %v250, 127
      %v369 = vpop.permute.xlu0 %368
      %370 = vrot.lane.b32.xlu0 %v253, 127
      %v371 = vpop.permute.xlu0 %370
      %vm372 = vcmp.lt.s32.totalorder %v200, 127
      %v373 = vsel %vm372, %v365, %v369
      %v374 = vsel %vm372, %v367, %v371
      %v375 = vsel %vm372, %v361, %v365
      %v376 = vsel %vm372, %v363, %v367
      %v377 = vsel %vm372, %v369, %v361
      %v378 = vsel %vm372, %v371, %v363
      %v379 = vpack.c.bf16 %v376, %v375
      %v380 = vpack.c.bf16 %v374, %v373
      %v381 = vpack.c.bf16 %v378, %v377
      %382 = vst [vmem:[#allocation2 + $0x78] sm:$0xff] %v379
      %383 = vst [vmem:[#allocation2 + $0x80] sm:$0xff] %v380
      %384 = vst [vmem:[#allocation2 + $0x88] sm:$0xff] %v381
      %385 = vrot.lane.b32.xlu0 %v248, 111
      %v386 = vpop.permute.xlu0 %385
      %387 = vrot.lane.b32.xlu0 %v251, 111
      %v388 = vpop.permute.xlu0 %387
      %389 = vrot.lane.b32.xlu0 %v249, 111
      %v390 = vpop.permute.xlu0 %389
      %391 = vrot.lane.b32.xlu0 %v252, 111
      %v392 = vpop.permute.xlu0 %391
      %393 = vrot.lane.b32.xlu0 %v250, 111
      %v394 = vpop.permute.xlu0 %393
      %395 = vrot.lane.b32.xlu0 %v253, 111
      %v396 = vpop.permute.xlu0 %395
      %vm397 = vcmp.lt.s32.totalorder %v200, 111
      %v398 = vsel %vm397, %v390, %v394
      %v399 = vsel %vm397, %v392, %v396
      %v400 = vsel %vm397, %v386, %v390
      %v401 = vsel %vm397, %v388, %v392
      %v402 = vsel %vm397, %v394, %v386
      %v403 = vsel %vm397, %v396, %v388
      %v404 = vpack.c.bf16 %v401, %v400
      %v405 = vpack.c.bf16 %v399, %v398
      %v406 = vpack.c.bf16 %v403, %v402
      %407 = vst [vmem:[#allocation2 + $0x90] sm:$0xff] %v404
      %408 = vst [vmem:[#allocation2 + $0x98] sm:$0xff] %v405
      %409 = vst [vmem:[#allocation2 + $0xa0] sm:$0xff] %v406
      %410 = vrot.lane.b32.xlu0 %v248, 110
      %v411 = vpop.permute.xlu0 %410
      %412 = vrot.lane.b32.xlu0 %v251, 110
      %v413 = vpop.permute.xlu0 %412
      %414 = vrot.lane.b32.xlu0 %v249, 110
      %v415 = vpop.permute.xlu0 %414
      %416 = vrot.lane.b32.xlu0 %v252, 110
      %v417 = vpop.permute.xlu0 %416
      %418 = vrot.lane.b32.xlu0 %v250, 110
      %v419 = vpop.permute.xlu0 %418
      %420 = vrot.lane.b32.xlu0 %v253, 110
      %v421 = vpop.permute.xlu0 %420
      %vm422 = vcmp.lt.s32.totalorder %v200, 110
      %v423 = vsel %vm422, %v415, %v419
      %v424 = vsel %vm422, %v417, %v421
      %v425 = vsel %vm422, %v411, %v415
      %v426 = vsel %vm422, %v413, %v417
      %v427 = vsel %vm422, %v419, %v411
      %v428 = vsel %vm422, %v421, %v413
      %v429 = vpack.c.bf16 %v426, %v425
      %v430 = vpack.c.bf16 %v424, %v423
      %v431 = vpack.c.bf16 %v428, %v427
      %432 = vst [vmem:[#allocation2 + $0xa8] sm:$0xff] %v429
      %433 = vst [vmem:[#allocation2 + $0xb0] sm:$0xff] %v430
      %434 = vst [vmem:[#allocation2 + $0xb8] sm:$0xff] %v431
      %435 = vrot.lane.b32.xlu0 %v248, 109
      %v436 = vpop.permute.xlu0 %435
      %437 = vrot.lane.b32.xlu0 %v251, 109
      %v438 = vpop.permute.xlu0 %437
      %439 = vrot.lane.b32.xlu0 %v249, 109
      %v440 = vpop.permute.xlu0 %439
      %441 = vrot.lane.b32.xlu0 %v252, 109
      %v442 = vpop.permute.xlu0 %441
      %443 = vrot.lane.b32.xlu0 %v250, 109
      %v444 = vpop.permute.xlu0 %443
      %445 = vrot.lane.b32.xlu0 %v253, 109
      %v446 = vpop.permute.xlu0 %445
      %vm447 = vcmp.lt.s32.totalorder %v200, 109
      %v448 = vsel %vm447, %v440, %v444
      %v449 = vsel %vm447, %v442, %v446
      %v450 = vsel %vm447, %v436, %v440
      %v451 = vsel %vm447, %v438, %v442
      %v452 = vsel %vm447, %v444, %v436
      %v453 = vsel %vm447, %v446, %v438
      %v454 = vpack.c.bf16 %v451, %v450
      %v455 = vpack.c.bf16 %v449, %v448
      %v456 = vpack.c.bf16 %v453, %v452
      %457 = vst [vmem:[#allocation2 + $0xc0] sm:$0xff] %v454
      %458 = vst [vmem:[#allocation2 + $0xc8] sm:$0xff] %v455
      %459 = vst [vmem:[#allocation2 + $0xd0] sm:$0xff] %v456
      %v460 = vld [vmem:[%s1] sm:$0xff]
      %v461 = vld [vmem:[%s1 + $0x8] sm:$0xff]
      %v462 = vld [vmem:[#allocation2] sm:$0xff]
      %v463 = vld [vmem:[#allocation2 + $0x8] sm:$0xff]
      %v464 = vld [vmem:[#allocation2 + $0x10] sm:$0xff]
      %v465 = vld [vmem:[#allocation2 + $0x18] sm:$0xff]
      %v466 = vld [vmem:[#allocation2 + $0x20] sm:$0xff]
      %v467 = vld [vmem:[#allocation2 + $0x28] sm:$0xff]
      %v468 = vld [vmem:[#allocation2 + $0x30] sm:$0xff]
      %v469 = vld [vmem:[#allocation2 + $0x38] sm:$0xff]
      %v470 = vld [vmem:[#allocation2 + $0x40] sm:$0xff]
      %v471 = vld [vmem:[#allocation2 + $0x48] sm:$0xff]
      %v472 = vld [vmem:[#allocation2 + $0x50] sm:$0xff]
      %v473 = vld [vmem:[#allocation2 + $0x58] sm:$0xff]
      %v474 = vld [vmem:[#allocation2 + $0x60] sm:$0xff]
      %v475 = vld [vmem:[#allocation2 + $0x68] sm:$0xff]
      %v476 = vld [vmem:[#allocation2 + $0x70] sm:$0xff]
      %v477 = vld [vmem:[#allocation2 + $0x78] sm:$0xff]
      %v478 = vld [vmem:[#allocation2 + $0x80] sm:$0xff]
      %v479 = vld [vmem:[#allocation2 + $0x88] sm:$0xff]
      %v480 = vld [vmem:[#allocation2 + $0x90] sm:$0xff]
      %v481 = vld [vmem:[#allocation2 + $0x98] sm:$0xff]
      %v482 = vld [vmem:[#allocation2 + $0xa0] sm:$0xff]
      %v483 = vld [vmem:[#allocation2 + $0xa8] sm:$0xff]
      %v484 = vld [vmem:[#allocation2 + $0xb0] sm:$0xff]
      %v485 = vld [vmem:[#allocation2 + $0xb8] sm:$0xff]
      %v486 = vld [vmem:[#allocation2 + $0xc0] sm:$0xff]
      %v487 = vld [vmem:[#allocation2 + $0xc8] sm:$0xff]
      %v488 = vld [vmem:[#allocation2 + $0xd0] sm:$0xff]
      %v491 = vunpack.c.l.b16 %v460
      %v492 = vunpack.c.h.b16 %v460
      %v493 = vunpack.c.l.b16 %v461
      %v494 = vunpack.c.h.b16 %v461
      %v495 = vpack.c.b16 %v493, %v491
      %v496 = vpack.c.b16 %v494, %v492
      %vm498 = vcmask 130048
      %v500 = vsel %vm498, %v496, 0
      %502 = vmatprep.subr.bf16.mxu0 %v463
      %503 = vmatpush1.bf16.msra.mxu0 %v462
      %504 = vmatprep.subr.bf16.mxu0 %v466
      %505 = vmatpush1.bf16.msra.mxu0 %v465
      %506 = vmatprep.subr.bf16.mxu0 %v469
      %507 = vmatpush1.bf16.msra.mxu0 %v468
      %508 = vmatprep.subr.bf16.mxu0 %v472
      %509 = vmatpush1.bf16.msra.mxu0 %v471
      %510 = vmatprep.subr.bf16.mxu0 %v475
      %511 = vmatpush1.bf16.msra.mxu0 %v474
      %512 = vmatprep.subr.bf16.mxu0 %v478
      %513 = vmatpush1.bf16.msra.mxu0 %v477
      %514 = vmatprep.subr.bf16.mxu0 %v481
      %515 = vmatpush1.bf16.msra.mxu0 %v480
      %516 = vmatprep.subr.bf16.mxu0 %v484
      %517 = vmatpush1.bf16.msra.mxu0 %v483
      %518 = vmatprep.subr.bf16.mxu0 %v487
      %519 = vmatpush1.bf16.msra.mxu0 %v486
      %520 = vmatprep.subr.bf16.mxu0 0
      %521 = vmatpush1.bf16.msra.mxu0 0
      %522 = vmatprep.subr.bf16.mxu0 0
      %523 = vmatpush1.bf16.msra.mxu0 0
      %524 = vmatprep.subr.bf16.mxu0 0
      %525 = vmatpush1.bf16.msra.mxu0 0
      %526 = vmatprep.subr.bf16.mxu0 0
      %527 = vmatpush1.bf16.msra.mxu0 0
      %528 = vmatprep.subr.bf16.mxu0 0
      %529 = vmatpush1.bf16.msra.mxu0 0
      %530 = vmatprep.subr.bf16.mxu0 0
      %531 = vmatpush1.bf16.msra.mxu0 0
      %532 = vmatprep.subr.bf16.mxu0 0
      %533 = vmatpush1.bf16.msra.mxu0 0
      %534 = vmatprep.mubr.bf16.mxu0 %v500
      %535 = vmatmul.mubr.bf16.gmra.mrb[0].mxu0 %v495
      %v536 = vpop.f32.mrb[0].mxu0
      %v537 = vadd.f32 0.0, %v536
      %v538 = vpop.f32.mrb[0].mxu0
      %v539 = vadd.f32 0.0, %v538
      %v540 = vpop.f32.mrb[0].mxu0
      %v541 = vadd.f32 0.0, %v540
      %v542 = vpop.f32.mrb[0].mxu0
      %v543 = vadd.f32 0.0, %v542
      %544 = vdwg.mxu0
      %545 = vmatprep.subr.bf16.mxu0 0
      %546 = vmatpush1.bf16.msra.mxu0 %v464
      %547 = vmatprep.subr.bf16.mxu0 0
      %548 = vmatpush1.bf16.msra.mxu0 %v467
      %549 = vmatprep.subr.bf16.mxu0 0
      %550 = vmatpush1.bf16.msra.mxu0 %v470
      %551 = vmatprep.subr.bf16.mxu0 0
      %552 = vmatpush1.bf16.msra.mxu0 %v473
      %553 = vmatprep.subr.bf16.mxu0 0
      %554 = vmatpush1.bf16.msra.mxu0 %v476
      %555 = vmatprep.subr.bf16.mxu0 0
      %556 = vmatpush1.bf16.msra.mxu0 %v479
      %557 = vmatprep.subr.bf16.mxu0 0
      %558 = vmatpush1.bf16.msra.mxu0 %v482
      %559 = vmatprep.subr.bf16.mxu0 0
      %560 = vmatpush1.bf16.msra.mxu0 %v485
      %561 = vmatprep.subr.bf16.mxu0 0
      %562 = vmatpush1.bf16.msra.mxu0 %v488
      %563 = vmatprep.subr.bf16.mxu0 0
      %564 = vmatpush1.bf16.msra.mxu0 0
      %565 = vmatprep.subr.bf16.mxu0 0
      %566 = vmatpush1.bf16.msra.mxu0 0
      %567 = vmatprep.subr.bf16.mxu0 0
      %568 = vmatpush1.bf16.msra.mxu0 0
      %569 = vmatprep.subr.bf16.mxu0 0
      %570 = vmatpush1.bf16.msra.mxu0 0
      %571 = vmatprep.subr.bf16.mxu0 0
      %572 = vmatpush1.bf16.msra.mxu0 0
      %573 = vmatprep.subr.bf16.mxu0 0
      %574 = vmatpush1.bf16.msra.mxu0 0
      %575 = vmatprep.subr.bf16.mxu0 0
      %576 = vmatpush1.bf16.msra.mxu0 0
      %577 = vmatprep.mubr.bf16.mxu0 %v500
      %578 = vmatmul.mubr.bf16.gmra.mrb[0].mxu0 %v495
      %v579 = vpop.f32.mrb[0].mxu0
      %v580 = vadd.f32 0.0, %v579
      %v581 = vpop.f32.mrb[0].mxu0
      %v582 = vpop.f32.mrb[0].mxu0
      %v583 = vadd.f32 0.0, %v582
      %v584 = vpop.f32.mrb[0].mxu0
      %585 = vdwg.mxu0
      %v586 = vld [vmem:[%s2] sm:$0xff]
      %v587 = vld [vmem:[%s2 + $0x8] sm:$0xff]
      %589 = vset.pattern.permute.xlu0 0
      %590 = vperm.xlu0 %589, %v586
      %v591 = vpop.permute.xlu0 %590
      %594 = vset.pattern.permute.xlu0 0
      %595 = vperm.xlu0 %594, %v587
      %v596 = vpop.permute.xlu0 %595
      %v598 = vmul.f32 %v537, %v591
      %v599 = vmul.f32 %v539, %v591
      %v600 = vmul.f32 %v580, %v591
      %v601 = vmul.f32 %v541, %v596
      %v602 = vmul.f32 %v543, %v596
      %v603 = vmul.f32 %v583, %v596
      %v604 = vld [vmem:[%s3] sm:$0xff]
      %v605 = vld [vmem:[%s3 + $0x8] sm:$0xff]
      %607 = vset.pattern.permute.xlu0 0
      %608 = vperm.xlu0 %607, %v604
      %v609 = vpop.permute.xlu0 %608
      %612 = vset.pattern.permute.xlu0 0
      %613 = vperm.xlu0 %612, %v605
      %v614 = vpop.permute.xlu0 %613
      %v616 = vadd.f32 %v598, %v609
      %v617 = vadd.f32 %v599, %v609
      %v618 = vadd.f32 %v600, %v609
      %v619 = vadd.f32 %v601, %v614
      %v620 = vadd.f32 %v602, %v614
      %v621 = vadd.f32 %v603, %v614
      %v622 = vmax.f32 %v616, 0.0
      %v623 = vmax.f32 %v617, 0.0
      %v624 = vmax.f32 %v618, 0.0
      %v625 = vmax.f32 %v619, 0.0
      %v626 = vmax.f32 %v620, 0.0
      %v627 = vmax.f32 %v621, 0.0
      %v628 = vmul.f32 %v622, %v245
      %v629 = vmul.f32 %v623, %v246
      %v630 = vmul.f32 %v624, %v247
      %v631 = vmul.f32 %v625, %v245
      %v632 = vmul.f32 %v626, %v246
      %v633 = vmul.f32 %v627, %v247
      %634 = vrot.lane.b32.xlu0 %v628, 19
      %v635 = vpop.permute.xlu0 %634
      %636 = vrot.lane.b32.xlu0 %v631, 19
      %v637 = vpop.permute.xlu0 %636
      %638 = vrot.lane.b32.xlu0 %v629, 19
      %v639 = vpop.permute.xlu0 %638
      %640 = vrot.lane.b32.xlu0 %v632, 19
      %v641 = vpop.permute.xlu0 %640
      %642 = vrot.lane.b32.xlu0 %v630, 19
      %v643 = vpop.permute.xlu0 %642
      %644 = vrot.lane.b32.xlu0 %v633, 19
      %v645 = vpop.permute.xlu0 %644
      %v646 = vsel %vm266, %v639, %v643
      %v647 = vsel %vm266, %v641, %v645
      %v648 = vsel %vm266, %v635, %v639
      %v649 = vsel %vm266, %v637, %v641
      %v650 = vsel %vm266, %v643, %v635
      %v651 = vsel %vm266, %v645, %v637
      %v652 = vpack.c.bf16 %v651, %v650
      %v653 = vpack.c.bf16 %v649, %v648
      %v654 = vpack.c.bf16 %v647, %v646
      %655 = vst [vmem:[#allocation2] sm:$0xff] %v652
      %656 = vst [vmem:[#allocation2 + $0x8] sm:$0xff] %v653
      %657 = vst [vmem:[#allocation2 + $0x10] sm:$0xff] %v654
      %658 = vrot.lane.b32.xlu0 %v628, 18
      %v659 = vpop.permute.xlu0 %658
      %660 = vrot.lane.b32.xlu0 %v631, 18
      %v661 = vpop.permute.xlu0 %660
      %662 = vrot.lane.b32.xlu0 %v629, 18
      %v663 = vpop.permute.xlu0 %662
      %664 = vrot.lane.b32.xlu0 %v632, 18
      %v665 = vpop.permute.xlu0 %664
      %666 = vrot.lane.b32.xlu0 %v630, 18
      %v667 = vpop.permute.xlu0 %666
      %668 = vrot.lane.b32.xlu0 %v633, 18
      %v669 = vpop.permute.xlu0 %668
      %v670 = vsel %vm291, %v663, %v667
      %v671 = vsel %vm291, %v665, %v669
      %v672 = vsel %vm291, %v659, %v663
      %v673 = vsel %vm291, %v661, %v665
      %v674 = vsel %vm291, %v667, %v659
      %v675 = vsel %vm291, %v669, %v661
      %v676 = vpack.c.bf16 %v675, %v674
      %v677 = vpack.c.bf16 %v673, %v672
      %v678 = vpack.c.bf16 %v671, %v670
      %679 = vst [vmem:[#allocation2 + $0x18] sm:$0xff] %v676
      %680 = vst [vmem:[#allocation2 + $0x20] sm:$0xff] %v677
      %681 = vst [vmem:[#allocation2 + $0x28] sm:$0xff] %v678
      %682 = vrot.lane.b32.xlu0 %v628, 17
      %v683 = vpop.permute.xlu0 %682
      %684 = vrot.lane.b32.xlu0 %v631, 17
      %v685 = vpop.permute.xlu0 %684
      %686 = vrot.lane.b32.xlu0 %v629, 17
      %v687 = vpop.permute.xlu0 %686
      %688 = vrot.lane.b32.xlu0 %v632, 17
      %v689 = vpop.permute.xlu0 %688
      %690 = vrot.lane.b32.xlu0 %v630, 17
      %v691 = vpop.permute.xlu0 %690
      %692 = vrot.lane.b32.xlu0 %v633, 17
      %v693 = vpop.permute.xlu0 %692
      %v694 = vsel %vm316, %v687, %v691
      %v695 = vsel %vm316, %v689, %v693
      %v696 = vsel %vm316, %v683, %v687
      %v697 = vsel %vm316, %v685, %v689
      %v698 = vsel %vm316, %v691, %v683
      %v699 = vsel %vm316, %v693, %v685
      %v700 = vpack.c.bf16 %v699, %v698
      %v701 = vpack.c.bf16 %v697, %v696
      %v702 = vpack.c.bf16 %v695, %v694
      %703 = vst [vmem:[#allocation2 + $0x30] sm:$0xff] %v700
      %704 = vst [vmem:[#allocation2 + $0x38] sm:$0xff] %v701
      %705 = vst [vmem:[#allocation2 + $0x40] sm:$0xff] %v702
      %706 = vrot.lane.b32.xlu0 %v628, 1
      %v707 = vpop.permute.xlu0 %706
      %708 = vrot.lane.b32.xlu0 %v631, 1
      %v709 = vpop.permute.xlu0 %708
      %710 = vrot.lane.b32.xlu0 %v629, 1
      %v711 = vpop.permute.xlu0 %710
      %712 = vrot.lane.b32.xlu0 %v632, 1
      %v713 = vpop.permute.xlu0 %712
      %714 = vrot.lane.b32.xlu0 %v630, 1
      %v715 = vpop.permute.xlu0 %714
      %716 = vrot.lane.b32.xlu0 %v633, 1
      %v717 = vpop.permute.xlu0 %716
      %v718 = vsel %vm341, %v711, %v715
      %v719 = vsel %vm341, %v713, %v717
      %v720 = vsel %vm341, %v707, %v711
      %v721 = vsel %vm341, %v709, %v713
      %v722 = vsel %vm341, %v715, %v707
      %v723 = vsel %vm341, %v717, %v709
      %v724 = vpack.c.bf16 %v723, %v722
      %v725 = vpack.c.bf16 %v721, %v720
      %v726 = vpack.c.bf16 %v719, %v718
      %727 = vst [vmem:[#allocation2 + $0x48] sm:$0xff] %v724
      %728 = vst [vmem:[#allocation2 + $0x50] sm:$0xff] %v725
      %729 = vst [vmem:[#allocation2 + $0x58] sm:$0xff] %v726
      %v730 = vpack.c.bf16 %v631, %v628
      %v731 = vpack.c.bf16 %v632, %v629
      %v732 = vpack.c.bf16 %v633, %v630
      %733 = vst [vmem:[#allocation2 + $0x60] sm:$0xff] %v730
      %734 = vst [vmem:[#allocation2 + $0x68] sm:$0xff] %v731
      %735 = vst [vmem:[#allocation2 + $0x70] sm:$0xff] %v732
      %736 = vrot.lane.b32.xlu0 %v628, 127
      %v737 = vpop.permute.xlu0 %736
      %738 = vrot.lane.b32.xlu0 %v631, 127
      %v739 = vpop.permute.xlu0 %738
      %740 = vrot.lane.b32.xlu0 %v629, 127
      %v741 = vpop.permute.xlu0 %740
      %742 = vrot.lane.b32.xlu0 %v632, 127
      %v743 = vpop.permute.xlu0 %742
      %744 = vrot.lane.b32.xlu0 %v630, 127
      %v745 = vpop.permute.xlu0 %744
      %746 = vrot.lane.b32.xlu0 %v633, 127
      %v747 = vpop.permute.xlu0 %746
      %v748 = vsel %vm372, %v741, %v745
      %v749 = vsel %vm372, %v743, %v747
      %v750 = vsel %vm372, %v737, %v741
      %v751 = vsel %vm372, %v739, %v743
      %v752 = vsel %vm372, %v745, %v737
      %v753 = vsel %vm372, %v747, %v739
      %v754 = vpack.c.bf16 %v751, %v750
      %v755 = vpack.c.bf16 %v749, %v748
      %v756 = vpack.c.bf16 %v753, %v752
      %757 = vst [vmem:[#allocation2 + $0x78] sm:$0xff] %v754
      %758 = vst [vmem:[#allocation2 + $0x80] sm:$0xff] %v755
      %759 = vst [vmem:[#allocation2 + $0x88] sm:$0xff] %v756
      %760 = vrot.lane.b32.xlu0 %v628, 111
      %v761 = vpop.permute.xlu0 %760
      %762 = vrot.lane.b32.xlu0 %v631, 111
      %v763 = vpop.permute.xlu0 %762
      %764 = vrot.lane.b32.xlu0 %v629, 111
      %v765 = vpop.permute.xlu0 %764
      %766 = vrot.lane.b32.xlu0 %v632, 111
      %v767 = vpop.permute.xlu0 %766
      %768 = vrot.lane.b32.xlu0 %v630, 111
      %v769 = vpop.permute.xlu0 %768
      %770 = vrot.lane.b32.xlu0 %v633, 111
      %v771 = vpop.permute.xlu0 %770
      %v772 = vsel %vm397, %v765, %v769
      %v773 = vsel %vm397, %v767, %v771
      %v774 = vsel %vm397, %v761, %v765
      %v775 = vsel %vm397, %v763, %v767
      %v776 = vsel %vm397, %v769, %v761
      %v777 = vsel %vm397, %v771, %v763
      %v778 = vpack.c.bf16 %v775, %v774
      %v779 = vpack.c.bf16 %v773, %v772
      %v780 = vpack.c.bf16 %v777, %v776
      %781 = vst [vmem:[#allocation2 + $0x90] sm:$0xff] %v778
      %782 = vst [vmem:[#allocation2 + $0x98] sm:$0xff] %v779
      %783 = vst [vmem:[#allocation2 + $0xa0] sm:$0xff] %v780
      %784 = vrot.lane.b32.xlu0 %v628, 110
      %v785 = vpop.permute.xlu0 %784
      %786 = vrot.lane.b32.xlu0 %v631, 110
      %v787 = vpop.permute.xlu0 %786
      %788 = vrot.lane.b32.xlu0 %v629, 110
      %v789 = vpop.permute.xlu0 %788
      %790 = vrot.lane.b32.xlu0 %v632, 110
      %v791 = vpop.permute.xlu0 %790
      %792 = vrot.lane.b32.xlu0 %v630, 110
      %v793 = vpop.permute.xlu0 %792
      %794 = vrot.lane.b32.xlu0 %v633, 110
      %v795 = vpop.permute.xlu0 %794
      %v796 = vsel %vm422, %v789, %v793
      %v797 = vsel %vm422, %v791, %v795
      %v798 = vsel %vm422, %v785, %v789
      %v799 = vsel %vm422, %v787, %v791
      %v800 = vsel %vm422, %v793, %v785
      %v801 = vsel %vm422, %v795, %v787
      %v802 = vpack.c.bf16 %v799, %v798
      %v803 = vpack.c.bf16 %v797, %v796
      %v804 = vpack.c.bf16 %v801, %v800
      %805 = vst [vmem:[#allocation2 + $0xa8] sm:$0xff] %v802
      %806 = vst [vmem:[#allocation2 + $0xb0] sm:$0xff] %v803
      %807 = vst [vmem:[#allocation2 + $0xb8] sm:$0xff] %v804
      %808 = vrot.lane.b32.xlu0 %v628, 109
      %v809 = vpop.permute.xlu0 %808
      %810 = vrot.lane.b32.xlu0 %v631, 109
      %v811 = vpop.permute.xlu0 %810
      %812 = vrot.lane.b32.xlu0 %v629, 109
      %v813 = vpop.permute.xlu0 %812
      %814 = vrot.lane.b32.xlu0 %v632, 109
      %v815 = vpop.permute.xlu0 %814
      %816 = vrot.lane.b32.xlu0 %v630, 109
      %v817 = vpop.permute.xlu0 %816
      %818 = vrot.lane.b32.xlu0 %v633, 109
      %v819 = vpop.permute.xlu0 %818
      %v820 = vsel %vm447, %v813, %v817
      %v821 = vsel %vm447, %v815, %v819
      %v822 = vsel %vm447, %v809, %v813
      %v823 = vsel %vm447, %v811, %v815
      %v824 = vsel %vm447, %v817, %v809
      %v825 = vsel %vm447, %v819, %v811
      %v826 = vpack.c.bf16 %v823, %v822
      %v827 = vpack.c.bf16 %v821, %v820
      %v828 = vpack.c.bf16 %v825, %v824
      %829 = vst [vmem:[#allocation2 + $0xc0] sm:$0xff] %v826
      %830 = vst [vmem:[#allocation2 + $0xc8] sm:$0xff] %v827
      %831 = vst [vmem:[#allocation2 + $0xd0] sm:$0xff] %v828
      %s832 = scalar_lea.vmem %s1, 16
      %v833 = vld [vmem:[%s832] sm:$0xff]
      %v834 = vld [vmem:[%s832 + $0x8] sm:$0xff]
      %v835 = vld [vmem:[#allocation2] sm:$0xff]
      %v836 = vld [vmem:[#allocation2 + $0x8] sm:$0xff]
      %v837 = vld [vmem:[#allocation2 + $0x10] sm:$0xff]
      %v838 = vld [vmem:[#allocation2 + $0x18] sm:$0xff]
      %v839 = vld [vmem:[#allocation2 + $0x20] sm:$0xff]
      %v840 = vld [vmem:[#allocation2 + $0x28] sm:$0xff]
      %v841 = vld [vmem:[#allocation2 + $0x30] sm:$0xff]
      %v842 = vld [vmem:[#allocation2 + $0x38] sm:$0xff]
      %v843 = vld [vmem:[#allocation2 + $0x40] sm:$0xff]
      %v844 = vld [vmem:[#allocation2 + $0x48] sm:$0xff]
      %v845 = vld [vmem:[#allocation2 + $0x50] sm:$0xff]
      %v846 = vld [vmem:[#allocation2 + $0x58] sm:$0xff]
      %v847 = vld [vmem:[#allocation2 + $0x60] sm:$0xff]
      %v848 = vld [vmem:[#allocation2 + $0x68] sm:$0xff]
      %v849 = vld [vmem:[#allocation2 + $0x70] sm:$0xff]
      %v850 = vld [vmem:[#allocation2 + $0x78] sm:$0xff]
      %v851 = vld [vmem:[#allocation2 + $0x80] sm:$0xff]
      %v852 = vld [vmem:[#allocation2 + $0x88] sm:$0xff]
      %v853 = vld [vmem:[#allocation2 + $0x90] sm:$0xff]
      %v854 = vld [vmem:[#allocation2 + $0x98] sm:$0xff]
      %v855 = vld [vmem:[#allocation2 + $0xa0] sm:$0xff]
      %v856 = vld [vmem:[#allocation2 + $0xa8] sm:$0xff]
      %v857 = vld [vmem:[#allocation2 + $0xb0] sm:$0xff]
      %v858 = vld [vmem:[#allocation2 + $0xb8] sm:$0xff]
      %v859 = vld [vmem:[#allocation2 + $0xc0] sm:$0xff]
      %v860 = vld [vmem:[#allocation2 + $0xc8] sm:$0xff]
      %v861 = vld [vmem:[#allocation2 + $0xd0] sm:$0xff]
      %v864 = vunpack.c.l.b16 %v833
      %v865 = vunpack.c.h.b16 %v833
      %v866 = vunpack.c.l.b16 %v834
      %v867 = vunpack.c.h.b16 %v834
      %v868 = vpack.c.b16 %v866, %v864
      %v869 = vpack.c.b16 %v867, %v865
      %v872 = vsel %vm498, %v869, 0
      %874 = vmatprep.subr.bf16.mxu0 %v836
      %875 = vmatpush1.bf16.msra.mxu0 %v835
      %876 = vmatprep.subr.bf16.mxu0 %v839
      %877 = vmatpush1.bf16.msra.mxu0 %v838
      %878 = vmatprep.subr.bf16.mxu0 %v842
      %879 = vmatpush1.bf16.msra.mxu0 %v841
      %880 = vmatprep.subr.bf16.mxu0 %v845
      %881 = vmatpush1.bf16.msra.mxu0 %v844
      %882 = vmatprep.subr.bf16.mxu0 %v848
      %883 = vmatpush1.bf16.msra.mxu0 %v847
      %884 = vmatprep.subr.bf16.mxu0 %v851
      %885 = vmatpush1.bf16.msra.mxu0 %v850
      %886 = vmatprep.subr.bf16.mxu0 %v854
      %887 = vmatpush1.bf16.msra.mxu0 %v853
      %888 = vmatprep.subr.bf16.mxu0 %v857
      %889 = vmatpush1.bf16.msra.mxu0 %v856
      %890 = vmatprep.subr.bf16.mxu0 %v860
      %891 = vmatpush1.bf16.msra.mxu0 %v859
      %892 = vmatprep.subr.bf16.mxu0 0
      %893 = vmatpush1.bf16.msra.mxu0 0
      %894 = vmatprep.subr.bf16.mxu0 0
      %895 = vmatpush1.bf16.msra.mxu0 0
      %896 = vmatprep.subr.bf16.mxu0 0
      %897 = vmatpush1.bf16.msra.mxu0 0
      %898 = vmatprep.subr.bf16.mxu0 0
      %899 = vmatpush1.bf16.msra.mxu0 0
      %900 = vmatprep.subr.bf16.mxu0 0
      %901 = vmatpush1.bf16.msra.mxu0 0
      %902 = vmatprep.subr.bf16.mxu0 0
      %903 = vmatpush1.bf16.msra.mxu0 0
      %904 = vmatprep.subr.bf16.mxu0 0
      %905 = vmatpush1.bf16.msra.mxu0 0
      %906 = vmatprep.mubr.bf16.mxu0 %v872
      %907 = vmatmul.mubr.bf16.gmra.mrb[0].mxu0 %v868
      %v908 = vpop.f32.mrb[0].mxu0
      %v909 = vadd.f32 0.0, %v908
      %v910 = vpop.f32.mrb[0].mxu0
      %v911 = vadd.f32 0.0, %v910
      %v912 = vpop.f32.mrb[0].mxu0
      %v913 = vadd.f32 0.0, %v912
      %v914 = vpop.f32.mrb[0].mxu0
      %v915 = vadd.f32 0.0, %v914
      %916 = vdwg.mxu0
      %917 = vmatprep.subr.bf16.mxu0 0
      %918 = vmatpush1.bf16.msra.mxu0 %v837
      %919 = vmatprep.subr.bf16.mxu0 0
      %920 = vmatpush1.bf16.msra.mxu0 %v840
      %921 = vmatprep.subr.bf16.mxu0 0
      %922 = vmatpush1.bf16.msra.mxu0 %v843
      %923 = vmatprep.subr.bf16.mxu0 0
      %924 = vmatpush1.bf16.msra.mxu0 %v846
      %925 = vmatprep.subr.bf16.mxu0 0
      %926 = vmatpush1.bf16.msra.mxu0 %v849
      %927 = vmatprep.subr.bf16.mxu0 0
      %928 = vmatpush1.bf16.msra.mxu0 %v852
      %929 = vmatprep.subr.bf16.mxu0 0
      %930 = vmatpush1.bf16.msra.mxu0 %v855
      %931 = vmatprep.subr.bf16.mxu0 0
      %932 = vmatpush1.bf16.msra.mxu0 %v858
      %933 = vmatprep.subr.bf16.mxu0 0
      %934 = vmatpush1.bf16.msra.mxu0 %v861
      %935 = vmatprep.subr.bf16.mxu0 0
      %936 = vmatpush1.bf16.msra.mxu0 0
      %937 = vmatprep.subr.bf16.mxu0 0
      %938 = vmatpush1.bf16.msra.mxu0 0
      %939 = vmatprep.subr.bf16.mxu0 0
      %940 = vmatpush1.bf16.msra.mxu0 0
      %941 = vmatprep.subr.bf16.mxu0 0
      %942 = vmatpush1.bf16.msra.mxu0 0
      %943 = vmatprep.subr.bf16.mxu0 0
      %944 = vmatpush1.bf16.msra.mxu0 0
      %945 = vmatprep.subr.bf16.mxu0 0
      %946 = vmatpush1.bf16.msra.mxu0 0
      %947 = vmatprep.subr.bf16.mxu0 0
      %948 = vmatpush1.bf16.msra.mxu0 0
      %949 = vmatprep.mubr.bf16.mxu0 %v872
      %950 = vmatmul.mubr.bf16.gmra.mrb[0].mxu0 %v868
      %v951 = vpop.f32.mrb[0].mxu0
      %v952 = vadd.f32 0.0, %v951
      %v953 = vpop.f32.mrb[0].mxu0
      %v954 = vpop.f32.mrb[0].mxu0
      %v955 = vadd.f32 0.0, %v954
      %v956 = vpop.f32.mrb[0].mxu0
      %957 = vdwg.mxu0
      %s958 = scalar_lea.vmem %s2, 16
      %v959 = vld [vmem:[%s958] sm:$0xff]
      %v960 = vld [vmem:[%s958 + $0x8] sm:$0xff]
      %962 = vset.pattern.permute.xlu0 0
      %963 = vperm.xlu0 %962, %v959
      %v964 = vpop.permute.xlu0 %963
      %967 = vset.pattern.permute.xlu0 0
      %968 = vperm.xlu0 %967, %v960
      %v969 = vpop.permute.xlu0 %968
      %v971 = vmul.f32 %v909, %v964
      %v972 = vmul.f32 %v911, %v964
      %v973 = vmul.f32 %v952, %v964
      %v974 = vmul.f32 %v913, %v969
      %v975 = vmul.f32 %v915, %v969
      %v976 = vmul.f32 %v955, %v969
      %s977 = scalar_lea.vmem %s3, 16
      %v978 = vld [vmem:[%s977] sm:$0xff]
      %v979 = vld [vmem:[%s977 + $0x8] sm:$0xff]
      %981 = vset.pattern.permute.xlu0 0
      %982 = vperm.xlu0 %981, %v978
      %v983 = vpop.permute.xlu0 %982
      %986 = vset.pattern.permute.xlu0 0
      %987 = vperm.xlu0 %986, %v979
      %v988 = vpop.permute.xlu0 %987
      %v990 = vadd.f32 %v971, %v983
      %v991 = vadd.f32 %v972, %v983
      %v992 = vadd.f32 %v973, %v983
      %v993 = vadd.f32 %v974, %v988
      %v994 = vadd.f32 %v975, %v988
      %v995 = vadd.f32 %v976, %v988
      %v996 = vmax.f32 %v990, 0.0
      %v997 = vmax.f32 %v991, 0.0
      %v998 = vmax.f32 %v992, 0.0
      %v999 = vmax.f32 %v993, 0.0
      %v1000 = vmax.f32 %v994, 0.0
      %v1001 = vmax.f32 %v995, 0.0
      %v1002 = vmul.f32 %v996, %v245
      %v1003 = vmul.f32 %v997, %v246
      %v1004 = vmul.f32 %v998, %v247
      %v1005 = vmul.f32 %v999, %v245
      %v1006 = vmul.f32 %v1000, %v246
      %v1007 = vmul.f32 %v1001, %v247
      %1008 = vrot.lane.b32.xlu0 %v1002, 19
      %v1009 = vpop.permute.xlu0 %1008
      %1010 = vrot.lane.b32.xlu0 %v1005, 19
      %v1011 = vpop.permute.xlu0 %1010
      %1012 = vrot.lane.b32.xlu0 %v1003, 19
      %v1013 = vpop.permute.xlu0 %1012
      %1014 = vrot.lane.b32.xlu0 %v1006, 19
      %v1015 = vpop.permute.xlu0 %1014
      %1016 = vrot.lane.b32.xlu0 %v1004, 19
      %v1017 = vpop.permute.xlu0 %1016
      %1018 = vrot.lane.b32.xlu0 %v1007, 19
      %v1019 = vpop.permute.xlu0 %1018
      %v1020 = vsel %vm266, %v1013, %v1017
      %v1021 = vsel %vm266, %v1015, %v1019
      %v1022 = vsel %vm266, %v1009, %v1013
      %v1023 = vsel %vm266, %v1011, %v1015
      %v1024 = vsel %vm266, %v1017, %v1009
      %v1025 = vsel %vm266, %v1019, %v1011
      %v1026 = vpack.c.bf16 %v1025, %v1024
      %v1027 = vpack.c.bf16 %v1023, %v1022
      %v1028 = vpack.c.bf16 %v1021, %v1020
      %1029 = vst [vmem:[#allocation2] sm:$0xff] %v1026
      %1030 = vst [vmem:[#allocation2 + $0x8] sm:$0xff] %v1027
      %1031 = vst [vmem:[#allocation2 + $0x10] sm:$0xff] %v1028
      %1032 = vrot.lane.b32.xlu0 %v1002, 18
      %v1033 = vpop.permute.xlu0 %1032
      %1034 = vrot.lane.b32.xlu0 %v1005, 18
      %v1035 = vpop.permute.xlu0 %1034
      %1036 = vrot.lane.b32.xlu0 %v1003, 18
      %v1037 = vpop.permute.xlu0 %1036
      %1038 = vrot.lane.b32.xlu0 %v1006, 18
      %v1039 = vpop.permute.xlu0 %1038
      %1040 = vrot.lane.b32.xlu0 %v1004, 18
      %v1041 = vpop.permute.xlu0 %1040
      %1042 = vrot.lane.b32.xlu0 %v1007, 18
      %v1043 = vpop.permute.xlu0 %1042
      %v1044 = vsel %vm291, %v1037, %v1041
      %v1045 = vsel %vm291, %v1039, %v1043
      %v1046 = vsel %vm291, %v1033, %v1037
      %v1047 = vsel %vm291, %v1035, %v1039
      %v1048 = vsel %vm291, %v1041, %v1033
      %v1049 = vsel %vm291, %v1043, %v1035
      %v1050 = vpack.c.bf16 %v1049, %v1048
      %v1051 = vpack.c.bf16 %v1047, %v1046
      %v1052 = vpack.c.bf16 %v1045, %v1044
      %1053 = vst [vmem:[#allocation2 + $0x18] sm:$0xff] %v1050
      %1054 = vst [vmem:[#allocation2 + $0x20] sm:$0xff] %v1051
      %1055 = vst [vmem:[#allocation2 + $0x28] sm:$0xff] %v1052
      %1056 = vrot.lane.b32.xlu0 %v1002, 17
      %v1057 = vpop.permute.xlu0 %1056
      %1058 = vrot.lane.b32.xlu0 %v1005, 17
      %v1059 = vpop.permute.xlu0 %1058
      %1060 = vrot.lane.b32.xlu0 %v1003, 17
      %v1061 = vpop.permute.xlu0 %1060
      %1062 = vrot.lane.b32.xlu0 %v1006, 17
      %v1063 = vpop.permute.xlu0 %1062
      %1064 = vrot.lane.b32.xlu0 %v1004, 17
      %v1065 = vpop.permute.xlu0 %1064
      %1066 = vrot.lane.b32.xlu0 %v1007, 17
      %v1067 = vpop.permute.xlu0 %1066
      %v1068 = vsel %vm316, %v1061, %v1065
      %v1069 = vsel %vm316, %v1063, %v1067
      %v1070 = vsel %vm316, %v1057, %v1061
      %v1071 = vsel %vm316, %v1059, %v1063
      %v1072 = vsel %vm316, %v1065, %v1057
      %v1073 = vsel %vm316, %v1067, %v1059
      %v1074 = vpack.c.bf16 %v1073, %v1072
      %v1075 = vpack.c.bf16 %v1071, %v1070
      %v1076 = vpack.c.bf16 %v1069, %v1068
      %1077 = vst [vmem:[#allocation2 + $0x30] sm:$0xff] %v1074
      %1078 = vst [vmem:[#allocation2 + $0x38] sm:$0xff] %v1075
      %1079 = vst [vmem:[#allocation2 + $0x40] sm:$0xff] %v1076
      %1080 = vrot.lane.b32.xlu0 %v1002, 1
      %v1081 = vpop.permute.xlu0 %1080
      %1082 = vrot.lane.b32.xlu0 %v1005, 1
      %v1083 = vpop.permute.xlu0 %1082
      %1084 = vrot.lane.b32.xlu0 %v1003, 1
      %v1085 = vpop.permute.xlu0 %1084
      %1086 = vrot.lane.b32.xlu0 %v1006, 1
      %v1087 = vpop.permute.xlu0 %1086
      %1088 = vrot.lane.b32.xlu0 %v1004, 1
      %v1089 = vpop.permute.xlu0 %1088
      %1090 = vrot.lane.b32.xlu0 %v1007, 1
      %v1091 = vpop.permute.xlu0 %1090
      %v1092 = vsel %vm341, %v1085, %v1089
      %v1093 = vsel %vm341, %v1087, %v1091
      %v1094 = vsel %vm341, %v1081, %v1085
      %v1095 = vsel %vm341, %v1083, %v1087
      %v1096 = vsel %vm341, %v1089, %v1081
      %v1097 = vsel %vm341, %v1091, %v1083
      %v1098 = vpack.c.bf16 %v1097, %v1096
      %v1099 = vpack.c.bf16 %v1095, %v1094
      %v1100 = vpack.c.bf16 %v1093, %v1092
      %1101 = vst [vmem:[#allocation2 + $0x48] sm:$0xff] %v1098
      %1102 = vst [vmem:[#allocation2 + $0x50] sm:$0xff] %v1099
      %1103 = vst [vmem:[#allocation2 + $0x58] sm:$0xff] %v1100
      %v1104 = vpack.c.bf16 %v1005, %v1002
      %v1105 = vpack.c.bf16 %v1006, %v1003
      %v1106 = vpack.c.bf16 %v1007, %v1004
      %1107 = vst [vmem:[#allocation2 + $0x60] sm:$0xff] %v1104
      %1108 = vst [vmem:[#allocation2 + $0x68] sm:$0xff] %v1105
      %1109 = vst [vmem:[#allocation2 + $0x70] sm:$0xff] %v1106
      %1110 = vrot.lane.b32.xlu0 %v1002, 127
      %v1111 = vpop.permute.xlu0 %1110
      %1112 = vrot.lane.b32.xlu0 %v1005, 127
      %v1113 = vpop.permute.xlu0 %1112
      %1114 = vrot.lane.b32.xlu0 %v1003, 127
      %v1115 = vpop.permute.xlu0 %1114
      %1116 = vrot.lane.b32.xlu0 %v1006, 127
      %v1117 = vpop.permute.xlu0 %1116
      %1118 = vrot.lane.b32.xlu0 %v1004, 127
      %v1119 = vpop.permute.xlu0 %1118
      %1120 = vrot.lane.b32.xlu0 %v1007, 127
      %v1121 = vpop.permute.xlu0 %1120
      %v1122 = vsel %vm372, %v1115, %v1119
      %v1123 = vsel %vm372, %v1117, %v1121
      %v1124 = vsel %vm372, %v1111, %v1115
      %v1125 = vsel %vm372, %v1113, %v1117
      %v1126 = vsel %vm372, %v1119, %v1111
      %v1127 = vsel %vm372, %v1121, %v1113
      %v1128 = vpack.c.bf16 %v1125, %v1124
      %v1129 = vpack.c.bf16 %v1123, %v1122
      %v1130 = vpack.c.bf16 %v1127, %v1126
      %1131 = vst [vmem:[#allocation2 + $0x78] sm:$0xff] %v1128
      %1132 = vst [vmem:[#allocation2 + $0x80] sm:$0xff] %v1129
      %1133 = vst [vmem:[#allocation2 + $0x88] sm:$0xff] %v1130
      %1134 = vrot.lane.b32.xlu0 %v1002, 111
      %v1135 = vpop.permute.xlu0 %1134
      %1136 = vrot.lane.b32.xlu0 %v1005, 111
      %v1137 = vpop.permute.xlu0 %1136
      %1138 = vrot.lane.b32.xlu0 %v1003, 111
      %v1139 = vpop.permute.xlu0 %1138
      %1140 = vrot.lane.b32.xlu0 %v1006, 111
      %v1141 = vpop.permute.xlu0 %1140
      %1142 = vrot.lane.b32.xlu0 %v1004, 111
      %v1143 = vpop.permute.xlu0 %1142
      %1144 = vrot.lane.b32.xlu0 %v1007, 111
      %v1145 = vpop.permute.xlu0 %1144
      %v1146 = vsel %vm397, %v1139, %v1143
      %v1147 = vsel %vm397, %v1141, %v1145
      %v1148 = vsel %vm397, %v1135, %v1139
      %v1149 = vsel %vm397, %v1137, %v1141
      %v1150 = vsel %vm397, %v1143, %v1135
      %v1151 = vsel %vm397, %v1145, %v1137
      %v1152 = vpack.c.bf16 %v1149, %v1148
      %v1153 = vpack.c.bf16 %v1147, %v1146
      %v1154 = vpack.c.bf16 %v1151, %v1150
      %1155 = vst [vmem:[#allocation2 + $0x90] sm:$0xff] %v1152
      %1156 = vst [vmem:[#allocation2 + $0x98] sm:$0xff] %v1153
      %1157 = vst [vmem:[#allocation2 + $0xa0] sm:$0xff] %v1154
      %1158 = vrot.lane.b32.xlu0 %v1002, 110
      %v1159 = vpop.permute.xlu0 %1158
      %1160 = vrot.lane.b32.xlu0 %v1005, 110
      %v1161 = vpop.permute.xlu0 %1160
      %1162 = vrot.lane.b32.xlu0 %v1003, 110
      %v1163 = vpop.permute.xlu0 %1162
      %1164 = vrot.lane.b32.xlu0 %v1006, 110
      %v1165 = vpop.permute.xlu0 %1164
      %1166 = vrot.lane.b32.xlu0 %v1004, 110
      %v1167 = vpop.permute.xlu0 %1166
      %1168 = vrot.lane.b32.xlu0 %v1007, 110
      %v1169 = vpop.permute.xlu0 %1168
      %v1170 = vsel %vm422, %v1163, %v1167
      %v1171 = vsel %vm422, %v1165, %v1169
      %v1172 = vsel %vm422, %v1159, %v1163
      %v1173 = vsel %vm422, %v1161, %v1165
      %v1174 = vsel %vm422, %v1167, %v1159
      %v1175 = vsel %vm422, %v1169, %v1161
      %v1176 = vpack.c.bf16 %v1173, %v1172
      %v1177 = vpack.c.bf16 %v1171, %v1170
      %v1178 = vpack.c.bf16 %v1175, %v1174
      %1179 = vst [vmem:[#allocation2 + $0xa8] sm:$0xff] %v1176
      %1180 = vst [vmem:[#allocation2 + $0xb0] sm:$0xff] %v1177
      %1181 = vst [vmem:[#allocation2 + $0xb8] sm:$0xff] %v1178
      %1182 = vrot.lane.b32.xlu0 %v1002, 109
      %v1183 = vpop.permute.xlu0 %1182
      %1184 = vrot.lane.b32.xlu0 %v1005, 109
      %v1185 = vpop.permute.xlu0 %1184
      %1186 = vrot.lane.b32.xlu0 %v1003, 109
      %v1187 = vpop.permute.xlu0 %1186
      %1188 = vrot.lane.b32.xlu0 %v1006, 109
      %v1189 = vpop.permute.xlu0 %1188
      %1190 = vrot.lane.b32.xlu0 %v1004, 109
      %v1191 = vpop.permute.xlu0 %1190
      %1192 = vrot.lane.b32.xlu0 %v1007, 109
      %v1193 = vpop.permute.xlu0 %1192
      %v1194 = vsel %vm447, %v1187, %v1191
      %v1195 = vsel %vm447, %v1189, %v1193
      %v1196 = vsel %vm447, %v1183, %v1187
      %v1197 = vsel %vm447, %v1185, %v1189
      %v1198 = vsel %vm447, %v1191, %v1183
      %v1199 = vsel %vm447, %v1193, %v1185
      %v1200 = vpack.c.bf16 %v1197, %v1196
      %v1201 = vpack.c.bf16 %v1195, %v1194
      %v1202 = vpack.c.bf16 %v1199, %v1198
      %1203 = vst [vmem:[#allocation2 + $0xc0] sm:$0xff] %v1200
      %1204 = vst [vmem:[#allocation2 + $0xc8] sm:$0xff] %v1201
      %1205 = vst [vmem:[#allocation2 + $0xd0] sm:$0xff] %v1202
      %s1206 = scalar_lea.vmem %s1, 32
      %v1207 = vld [vmem:[%s1206] sm:$0xff]
      %v1208 = vld [vmem:[%s1206 + $0x8] sm:$0xff]
      %v1209 = vld [vmem:[#allocation2] sm:$0xff]
      %v1210 = vld [vmem:[#allocation2 + $0x8] sm:$0xff]
      %v1211 = vld [vmem:[#allocation2 + $0x10] sm:$0xff]
      %v1212 = vld [vmem:[#allocation2 + $0x18] sm:$0xff]
      %v1213 = vld [vmem:[#allocation2 + $0x20] sm:$0xff]
      %v1214 = vld [vmem:[#allocation2 + $0x28] sm:$0xff]
      %v1215 = vld [vmem:[#allocation2 + $0x30] sm:$0xff]
      %v1216 = vld [vmem:[#allocation2 + $0x38] sm:$0xff]
      %v1217 = vld [vmem:[#allocation2 + $0x40] sm:$0xff]
      %v1218 = vld [vmem:[#allocation2 + $0x48] sm:$0xff]
      %v1219 = vld [vmem:[#allocation2 + $0x50] sm:$0xff]
      %v1220 = vld [vmem:[#allocation2 + $0x58] sm:$0xff]
      %v1221 = vld [vmem:[#allocation2 + $0x60] sm:$0xff]
      %v1222 = vld [vmem:[#allocation2 + $0x68] sm:$0xff]
      %v1223 = vld [vmem:[#allocation2 + $0x70] sm:$0xff]
      %v1224 = vld [vmem:[#allocation2 + $0x78] sm:$0xff]
      %v1225 = vld [vmem:[#allocation2 + $0x80] sm:$0xff]
      %v1226 = vld [vmem:[#allocation2 + $0x88] sm:$0xff]
      %v1227 = vld [vmem:[#allocation2 + $0x90] sm:$0xff]
      %v1228 = vld [vmem:[#allocation2 + $0x98] sm:$0xff]
      %v1229 = vld [vmem:[#allocation2 + $0xa0] sm:$0xff]
      %v1230 = vld [vmem:[#allocation2 + $0xa8] sm:$0xff]
      %v1231 = vld [vmem:[#allocation2 + $0xb0] sm:$0xff]
      %v1232 = vld [vmem:[#allocation2 + $0xb8] sm:$0xff]
      %v1233 = vld [vmem:[#allocation2 + $0xc0] sm:$0xff]
      %v1234 = vld [vmem:[#allocation2 + $0xc8] sm:$0xff]
      %v1235 = vld [vmem:[#allocation2 + $0xd0] sm:$0xff]
      %v1238 = vunpack.c.l.b16 %v1207
      %v1239 = vunpack.c.h.b16 %v1207
      %v1240 = vunpack.c.l.b16 %v1208
      %v1241 = vunpack.c.h.b16 %v1208
      %v1242 = vpack.c.b16 %v1240, %v1238
      %v1243 = vpack.c.b16 %v1241, %v1239
      %v1246 = vsel %vm498, %v1243, 0
      %1248 = vmatprep.subr.bf16.mxu0 %v1210
      %1249 = vmatpush1.bf16.msra.mxu0 %v1209
      %1250 = vmatprep.subr.bf16.mxu0 %v1213
      %1251 = vmatpush1.bf16.msra.mxu0 %v1212
      %1252 = vmatprep.subr.bf16.mxu0 %v1216
      %1253 = vmatpush1.bf16.msra.mxu0 %v1215
      %1254 = vmatprep.subr.bf16.mxu0 %v1219
      %1255 = vmatpush1.bf16.msra.mxu0 %v1218
      %1256 = vmatprep.subr.bf16.mxu0 %v1222
      %1257 = vmatpush1.bf16.msra.mxu0 %v1221
      %1258 = vmatprep.subr.bf16.mxu0 %v1225
      %1259 = vmatpush1.bf16.msra.mxu0 %v1224
      %1260 = vmatprep.subr.bf16.mxu0 %v1228
      %1261 = vmatpush1.bf16.msra.mxu0 %v1227
      %1262 = vmatprep.subr.bf16.mxu0 %v1231
      %1263 = vmatpush1.bf16.msra.mxu0 %v1230
      %1264 = vmatprep.subr.bf16.mxu0 %v1234
      %1265 = vmatpush1.bf16.msra.mxu0 %v1233
      %1266 = vmatprep.subr.bf16.mxu0 0
      %1267 = vmatpush1.bf16.msra.mxu0 0
      %1268 = vmatprep.subr.bf16.mxu0 0
      %1269 = vmatpush1.bf16.msra.mxu0 0
      %1270 = vmatprep.subr.bf16.mxu0 0
      %1271 = vmatpush1.bf16.msra.mxu0 0
      %1272 = vmatprep.subr.bf16.mxu0 0
      %1273 = vmatpush1.bf16.msra.mxu0 0
      %1274 = vmatprep.subr.bf16.mxu0 0
      %1275 = vmatpush1.bf16.msra.mxu0 0
      %1276 = vmatprep.subr.bf16.mxu0 0
      %1277 = vmatpush1.bf16.msra.mxu0 0
      %1278 = vmatprep.subr.bf16.mxu0 0
      %1279 = vmatpush1.bf16.msra.mxu0 0
      %1280 = vmatprep.mubr.bf16.mxu0 %v1246
      %1281 = vmatmul.mubr.bf16.gmra.mrb[0].mxu0 %v1242
      %v1282 = vpop.f32.mrb[0].mxu0
      %v1283 = vadd.f32 0.0, %v1282
      %v1284 = vpop.f32.mrb[0].mxu0
      %v1285 = vadd.f32 0.0, %v1284
      %v1286 = vpop.f32.mrb[0].mxu0
      %v1287 = vadd.f32 0.0, %v1286
      %v1288 = vpop.f32.mrb[0].mxu0
      %v1289 = vadd.f32 0.0, %v1288
      %1290 = vdwg.mxu0
      %1291 = vmatprep.subr.bf16.mxu0 0
      %1292 = vmatpush1.bf16.msra.mxu0 %v1211
      %1293 = vmatprep.subr.bf16.mxu0 0
      %1294 = vmatpush1.bf16.msra.mxu0 %v1214
      %1295 = vmatprep.subr.bf16.mxu0 0
      %1296 = vmatpush1.bf16.msra.mxu0 %v1217
      %1297 = vmatprep.subr.bf16.mxu0 0
      %1298 = vmatpush1.bf16.msra.mxu0 %v1220
      %1299 = vmatprep.subr.bf16.mxu0 0
      %1300 = vmatpush1.bf16.msra.mxu0 %v1223
      %1301 = vmatprep.subr.bf16.mxu0 0
      %1302 = vmatpush1.bf16.msra.mxu0 %v1226
      %1303 = vmatprep.subr.bf16.mxu0 0
      %1304 = vmatpush1.bf16.msra.mxu0 %v1229
      %1305 = vmatprep.subr.bf16.mxu0 0
      %1306 = vmatpush1.bf16.msra.mxu0 %v1232
      %1307 = vmatprep.subr.bf16.mxu0 0
      %1308 = vmatpush1.bf16.msra.mxu0 %v1235
      %1309 = vmatprep.subr.bf16.mxu0 0
      %1310 = vmatpush1.bf16.msra.mxu0 0
      %1311 = vmatprep.subr.bf16.mxu0 0
      %1312 = vmatpush1.bf16.msra.mxu0 0
      %1313 = vmatprep.subr.bf16.mxu0 0
      %1314 = vmatpush1.bf16.msra.mxu0 0
      %1315 = vmatprep.subr.bf16.mxu0 0
      %1316 = vmatpush1.bf16.msra.mxu0 0
      %1317 = vmatprep.subr.bf16.mxu0 0
      %1318 = vmatpush1.bf16.msra.mxu0 0
      %1319 = vmatprep.subr.bf16.mxu0 0
      %1320 = vmatpush1.bf16.msra.mxu0 0
      %1321 = vmatprep.subr.bf16.mxu0 0
      %1322 = vmatpush1.bf16.msra.mxu0 0
      %1323 = vmatprep.mubr.bf16.mxu0 %v1246
      %1324 = vmatmul.mubr.bf16.gmra.mrb[0].mxu0 %v1242
      %v1325 = vpop.f32.mrb[0].mxu0
      %v1326 = vadd.f32 0.0, %v1325
      %v1327 = vpop.f32.mrb[0].mxu0
      %v1328 = vpop.f32.mrb[0].mxu0
      %v1329 = vadd.f32 0.0, %v1328
      %v1330 = vpop.f32.mrb[0].mxu0
      %1331 = vdwg.mxu0
      %s1332 = scalar_lea.vmem %s2, 32
      %v1333 = vld [vmem:[%s1332] sm:$0xff]
      %v1334 = vld [vmem:[%s1332 + $0x8] sm:$0xff]
      %1336 = vset.pattern.permute.xlu0 0
      %1337 = vperm.xlu0 %1336, %v1333
      %v1338 = vpop.permute.xlu0 %1337
      %1341 = vset.pattern.permute.xlu0 0
      %1342 = vperm.xlu0 %1341, %v1334
      %v1343 = vpop.permute.xlu0 %1342
      %v1345 = vmul.f32 %v1283, %v1338
      %v1346 = vmul.f32 %v1285, %v1338
      %v1347 = vmul.f32 %v1326, %v1338
      %v1348 = vmul.f32 %v1287, %v1343
      %v1349 = vmul.f32 %v1289, %v1343
      %v1350 = vmul.f32 %v1329, %v1343
      %s1351 = scalar_lea.vmem %s3, 32
      %v1352 = vld [vmem:[%s1351] sm:$0xff]
      %v1353 = vld [vmem:[%s1351 + $0x8] sm:$0xff]
      %1355 = vset.pattern.permute.xlu0 0
      %1356 = vperm.xlu0 %1355, %v1352
      %v1357 = vpop.permute.xlu0 %1356
      %1360 = vset.pattern.permute.xlu0 0
      %1361 = vperm.xlu0 %1360, %v1353
      %v1362 = vpop.permute.xlu0 %1361
      %v1364 = vadd.f32 %v1345, %v1357
      %v1365 = vadd.f32 %v1346, %v1357
      %v1366 = vadd.f32 %v1347, %v1357
      %v1367 = vadd.f32 %v1348, %v1362
      %v1368 = vadd.f32 %v1349, %v1362
      %v1369 = vadd.f32 %v1350, %v1362
      %v1370 = vmax.f32 %v1364, 0.0
      %v1371 = vmax.f32 %v1365, 0.0
      %v1372 = vmax.f32 %v1366, 0.0
      %v1373 = vmax.f32 %v1367, 0.0
      %v1374 = vmax.f32 %v1368, 0.0
      %v1375 = vmax.f32 %v1369, 0.0
      %v1376 = vadd.f32 %v1370, %v628
      %v1377 = vadd.f32 %v1371, %v629
      %v1378 = vadd.f32 %v1372, %v630
      %v1379 = vadd.f32 %v1373, %v631
      %v1380 = vadd.f32 %v1374, %v632
      %v1381 = vadd.f32 %v1375, %v633
      %v1382 = vmul.f32 %v1376, %v245
      %v1383 = vmul.f32 %v1377, %v246
      %v1384 = vmul.f32 %v1378, %v247
      %v1385 = vmul.f32 %v1379, %v245
      %v1386 = vmul.f32 %v1380, %v246
      %v1387 = vmul.f32 %v1381, %v247
      %1388 = vrot.lane.b32.xlu0 %v1382, 19
      %v1389 = vpop.permute.xlu0 %1388
      %1390 = vrot.lane.b32.xlu0 %v1385, 19
      %v1391 = vpop.permute.xlu0 %1390
      %1392 = vrot.lane.b32.xlu0 %v1383, 19
      %v1393 = vpop.permute.xlu0 %1392
      %1394 = vrot.lane.b32.xlu0 %v1386, 19
      %v1395 = vpop.permute.xlu0 %1394
      %1396 = vrot.lane.b32.xlu0 %v1384, 19
      %v1397 = vpop.permute.xlu0 %1396
      %1398 = vrot.lane.b32.xlu0 %v1387, 19
      %v1399 = vpop.permute.xlu0 %1398
      %v1400 = vsel %vm266, %v1393, %v1397
      %v1401 = vsel %vm266, %v1395, %v1399
      %v1402 = vsel %vm266, %v1389, %v1393
      %v1403 = vsel %vm266, %v1391, %v1395
      %v1404 = vsel %vm266, %v1397, %v1389
      %v1405 = vsel %vm266, %v1399, %v1391
      %v1406 = vpack.c.bf16 %v1405, %v1404
      %v1407 = vpack.c.bf16 %v1403, %v1402
      %v1408 = vpack.c.bf16 %v1401, %v1400
      %1409 = vst [vmem:[#allocation2] sm:$0xff] %v1406
      %1410 = vst [vmem:[#allocation2 + $0x8] sm:$0xff] %v1407
      %1411 = vst [vmem:[#allocation2 + $0x10] sm:$0xff] %v1408
      %1412 = vrot.lane.b32.xlu0 %v1382, 18
      %v1413 = vpop.permute.xlu0 %1412
      %1414 = vrot.lane.b32.xlu0 %v1385, 18
      %v1415 = vpop.permute.xlu0 %1414
      %1416 = vrot.lane.b32.xlu0 %v1383, 18
      %v1417 = vpop.permute.xlu0 %1416
      %1418 = vrot.lane.b32.xlu0 %v1386, 18
      %v1419 = vpop.permute.xlu0 %1418
      %1420 = vrot.lane.b32.xlu0 %v1384, 18
      %v1421 = vpop.permute.xlu0 %1420
      %1422 = vrot.lane.b32.xlu0 %v1387, 18
      %v1423 = vpop.permute.xlu0 %1422
      %v1424 = vsel %vm291, %v1417, %v1421
      %v1425 = vsel %vm291, %v1419, %v1423
      %v1426 = vsel %vm291, %v1413, %v1417
      %v1427 = vsel %vm291, %v1415, %v1419
      %v1428 = vsel %vm291, %v1421, %v1413
      %v1429 = vsel %vm291, %v1423, %v1415
      %v1430 = vpack.c.bf16 %v1429, %v1428
      %v1431 = vpack.c.bf16 %v1427, %v1426
      %v1432 = vpack.c.bf16 %v1425, %v1424
      %1433 = vst [vmem:[#allocation2 + $0x18] sm:$0xff] %v1430
      %1434 = vst [vmem:[#allocation2 + $0x20] sm:$0xff] %v1431
      %1435 = vst [vmem:[#allocation2 + $0x28] sm:$0xff] %v1432
      %1436 = vrot.lane.b32.xlu0 %v1382, 17
      %v1437 = vpop.permute.xlu0 %1436
      %1438 = vrot.lane.b32.xlu0 %v1385, 17
      %v1439 = vpop.permute.xlu0 %1438
      %1440 = vrot.lane.b32.xlu0 %v1383, 17
      %v1441 = vpop.permute.xlu0 %1440
      %1442 = vrot.lane.b32.xlu0 %v1386, 17
      %v1443 = vpop.permute.xlu0 %1442
      %1444 = vrot.lane.b32.xlu0 %v1384, 17
      %v1445 = vpop.permute.xlu0 %1444
      %1446 = vrot.lane.b32.xlu0 %v1387, 17
      %v1447 = vpop.permute.xlu0 %1446
      %v1448 = vsel %vm316, %v1441, %v1445
      %v1449 = vsel %vm316, %v1443, %v1447
      %v1450 = vsel %vm316, %v1437, %v1441
      %v1451 = vsel %vm316, %v1439, %v1443
      %v1452 = vsel %vm316, %v1445, %v1437
      %v1453 = vsel %vm316, %v1447, %v1439
      %v1454 = vpack.c.bf16 %v1453, %v1452
      %v1455 = vpack.c.bf16 %v1451, %v1450
      %v1456 = vpack.c.bf16 %v1449, %v1448
      %1457 = vst [vmem:[#allocation2 + $0x30] sm:$0xff] %v1454
      %1458 = vst [vmem:[#allocation2 + $0x38] sm:$0xff] %v1455
      %1459 = vst [vmem:[#allocation2 + $0x40] sm:$0xff] %v1456
      %1460 = vrot.lane.b32.xlu0 %v1382, 1
      %v1461 = vpop.permute.xlu0 %1460
      %1462 = vrot.lane.b32.xlu0 %v1385, 1
      %v1463 = vpop.permute.xlu0 %1462
      %1464 = vrot.lane.b32.xlu0 %v1383, 1
      %v1465 = vpop.permute.xlu0 %1464
      %1466 = vrot.lane.b32.xlu0 %v1386, 1
      %v1467 = vpop.permute.xlu0 %1466
      %1468 = vrot.lane.b32.xlu0 %v1384, 1
      %v1469 = vpop.permute.xlu0 %1468
      %1470 = vrot.lane.b32.xlu0 %v1387, 1
      %v1471 = vpop.permute.xlu0 %1470
      %v1472 = vsel %vm341, %v1465, %v1469
      %v1473 = vsel %vm341, %v1467, %v1471
      %v1474 = vsel %vm341, %v1461, %v1465
      %v1475 = vsel %vm341, %v1463, %v1467
      %v1476 = vsel %vm341, %v1469, %v1461
      %v1477 = vsel %vm341, %v1471, %v1463
      %v1478 = vpack.c.bf16 %v1477, %v1476
      %v1479 = vpack.c.bf16 %v1475, %v1474
      %v1480 = vpack.c.bf16 %v1473, %v1472
      %1481 = vst [vmem:[#allocation2 + $0x48] sm:$0xff] %v1478
      %1482 = vst [vmem:[#allocation2 + $0x50] sm:$0xff] %v1479
      %1483 = vst [vmem:[#allocation2 + $0x58] sm:$0xff] %v1480
      %v1484 = vpack.c.bf16 %v1385, %v1382
      %v1485 = vpack.c.bf16 %v1386, %v1383
      %v1486 = vpack.c.bf16 %v1387, %v1384
      %1487 = vst [vmem:[#allocation2 + $0x60] sm:$0xff] %v1484
      %1488 = vst [vmem:[#allocation2 + $0x68] sm:$0xff] %v1485
      %1489 = vst [vmem:[#allocation2 + $0x70] sm:$0xff] %v1486
      %1490 = vrot.lane.b32.xlu0 %v1382, 127
      %v1491 = vpop.permute.xlu0 %1490
      %1492 = vrot.lane.b32.xlu0 %v1385, 127
      %v1493 = vpop.permute.xlu0 %1492
      %1494 = vrot.lane.b32.xlu0 %v1383, 127
      %v1495 = vpop.permute.xlu0 %1494
      %1496 = vrot.lane.b32.xlu0 %v1386, 127
      %v1497 = vpop.permute.xlu0 %1496
      %1498 = vrot.lane.b32.xlu0 %v1384, 127
      %v1499 = vpop.permute.xlu0 %1498
      %1500 = vrot.lane.b32.xlu0 %v1387, 127
      %v1501 = vpop.permute.xlu0 %1500
      %v1502 = vsel %vm372, %v1495, %v1499
      %v1503 = vsel %vm372, %v1497, %v1501
      %v1504 = vsel %vm372, %v1491, %v1495
      %v1505 = vsel %vm372, %v1493, %v1497
      %v1506 = vsel %vm372, %v1499, %v1491
      %v1507 = vsel %vm372, %v1501, %v1493
      %v1508 = vpack.c.bf16 %v1505, %v1504
      %v1509 = vpack.c.bf16 %v1503, %v1502
      %v1510 = vpack.c.bf16 %v1507, %v1506
      %1511 = vst [vmem:[#allocation2 + $0x78] sm:$0xff] %v1508
      %1512 = vst [vmem:[#allocation2 + $0x80] sm:$0xff] %v1509
      %1513 = vst [vmem:[#allocation2 + $0x88] sm:$0xff] %v1510
      %1514 = vrot.lane.b32.xlu0 %v1382, 111
      %v1515 = vpop.permute.xlu0 %1514
      %1516 = vrot.lane.b32.xlu0 %v1385, 111
      %v1517 = vpop.permute.xlu0 %1516
      %1518 = vrot.lane.b32.xlu0 %v1383, 111
      %v1519 = vpop.permute.xlu0 %1518
      %1520 = vrot.lane.b32.xlu0 %v1386, 111
      %v1521 = vpop.permute.xlu0 %1520
      %1522 = vrot.lane.b32.xlu0 %v1384, 111
      %v1523 = vpop.permute.xlu0 %1522
      %1524 = vrot.lane.b32.xlu0 %v1387, 111
      %v1525 = vpop.permute.xlu0 %1524
      %v1526 = vsel %vm397, %v1519, %v1523
      %v1527 = vsel %vm397, %v1521, %v1525
      %v1528 = vsel %vm397, %v1515, %v1519
      %v1529 = vsel %vm397, %v1517, %v1521
      %v1530 = vsel %vm397, %v1523, %v1515
      %v1531 = vsel %vm397, %v1525, %v1517
      %v1532 = vpack.c.bf16 %v1529, %v1528
      %v1533 = vpack.c.bf16 %v1527, %v1526
      %v1534 = vpack.c.bf16 %v1531, %v1530
      %1535 = vst [vmem:[#allocation2 + $0x90] sm:$0xff] %v1532
      %1536 = vst [vmem:[#allocation2 + $0x98] sm:$0xff] %v1533
      %1537 = vst [vmem:[#allocation2 + $0xa0] sm:$0xff] %v1534
      %1538 = vrot.lane.b32.xlu0 %v1382, 110
      %v1539 = vpop.permute.xlu0 %1538
      %1540 = vrot.lane.b32.xlu0 %v1385, 110
      %v1541 = vpop.permute.xlu0 %1540
      %1542 = vrot.lane.b32.xlu0 %v1383, 110
      %v1543 = vpop.permute.xlu0 %1542
      %1544 = vrot.lane.b32.xlu0 %v1386, 110
      %v1545 = vpop.permute.xlu0 %1544
      %1546 = vrot.lane.b32.xlu0 %v1384, 110
      %v1547 = vpop.permute.xlu0 %1546
      %1548 = vrot.lane.b32.xlu0 %v1387, 110
      %v1549 = vpop.permute.xlu0 %1548
      %v1550 = vsel %vm422, %v1543, %v1547
      %v1551 = vsel %vm422, %v1545, %v1549
      %v1552 = vsel %vm422, %v1539, %v1543
      %v1553 = vsel %vm422, %v1541, %v1545
      %v1554 = vsel %vm422, %v1547, %v1539
      %v1555 = vsel %vm422, %v1549, %v1541
      %v1556 = vpack.c.bf16 %v1553, %v1552
      %v1557 = vpack.c.bf16 %v1551, %v1550
      %v1558 = vpack.c.bf16 %v1555, %v1554
      %1559 = vst [vmem:[#allocation2 + $0xa8] sm:$0xff] %v1556
      %1560 = vst [vmem:[#allocation2 + $0xb0] sm:$0xff] %v1557
      %1561 = vst [vmem:[#allocation2 + $0xb8] sm:$0xff] %v1558
      %1562 = vrot.lane.b32.xlu0 %v1382, 109
      %v1563 = vpop.permute.xlu0 %1562
      %1564 = vrot.lane.b32.xlu0 %v1385, 109
      %v1565 = vpop.permute.xlu0 %1564
      %1566 = vrot.lane.b32.xlu0 %v1383, 109
      %v1567 = vpop.permute.xlu0 %1566
      %1568 = vrot.lane.b32.xlu0 %v1386, 109
      %v1569 = vpop.permute.xlu0 %1568
      %1570 = vrot.lane.b32.xlu0 %v1384, 109
      %v1571 = vpop.permute.xlu0 %1570
      %1572 = vrot.lane.b32.xlu0 %v1387, 109
      %v1573 = vpop.permute.xlu0 %1572
      %v1574 = vsel %vm447, %v1567, %v1571
      %v1575 = vsel %vm447, %v1569, %v1573
      %v1576 = vsel %vm447, %v1563, %v1567
      %v1577 = vsel %vm447, %v1565, %v1569
      %v1578 = vsel %vm447, %v1571, %v1563
      %v1579 = vsel %vm447, %v1573, %v1565
      %v1580 = vpack.c.bf16 %v1577, %v1576
      %v1581 = vpack.c.bf16 %v1575, %v1574
      %v1582 = vpack.c.bf16 %v1579, %v1578
      %1583 = vst [vmem:[#allocation2 + $0xc0] sm:$0xff] %v1580
      %1584 = vst [vmem:[#allocation2 + $0xc8] sm:$0xff] %v1581
      %1585 = vst [vmem:[#allocation2 + $0xd0] sm:$0xff] %v1582
      %s1586 = scalar_lea.vmem %s1, 48
      %v1587 = vld [vmem:[%s1586] sm:$0xff]
      %v1588 = vld [vmem:[%s1586 + $0x8] sm:$0xff]
      %v1589 = vld [vmem:[#allocation2] sm:$0xff]
      %v1590 = vld [vmem:[#allocation2 + $0x8] sm:$0xff]
      %v1591 = vld [vmem:[#allocation2 + $0x10] sm:$0xff]
      %v1592 = vld [vmem:[#allocation2 + $0x18] sm:$0xff]
      %v1593 = vld [vmem:[#allocation2 + $0x20] sm:$0xff]
      %v1594 = vld [vmem:[#allocation2 + $0x28] sm:$0xff]
      %v1595 = vld [vmem:[#allocation2 + $0x30] sm:$0xff]
      %v1596 = vld [vmem:[#allocation2 + $0x38] sm:$0xff]
      %v1597 = vld [vmem:[#allocation2 + $0x40] sm:$0xff]
      %v1598 = vld [vmem:[#allocation2 + $0x48] sm:$0xff]
      %v1599 = vld [vmem:[#allocation2 + $0x50] sm:$0xff]
      %v1600 = vld [vmem:[#allocation2 + $0x58] sm:$0xff]
      %v1601 = vld [vmem:[#allocation2 + $0x60] sm:$0xff]
      %v1602 = vld [vmem:[#allocation2 + $0x68] sm:$0xff]
      %v1603 = vld [vmem:[#allocation2 + $0x70] sm:$0xff]
      %v1604 = vld [vmem:[#allocation2 + $0x78] sm:$0xff]
      %v1605 = vld [vmem:[#allocation2 + $0x80] sm:$0xff]
      %v1606 = vld [vmem:[#allocation2 + $0x88] sm:$0xff]
      %v1607 = vld [vmem:[#allocation2 + $0x90] sm:$0xff]
      %v1608 = vld [vmem:[#allocation2 + $0x98] sm:$0xff]
      %v1609 = vld [vmem:[#allocation2 + $0xa0] sm:$0xff]
      %v1610 = vld [vmem:[#allocation2 + $0xa8] sm:$0xff]
      %v1611 = vld [vmem:[#allocation2 + $0xb0] sm:$0xff]
      %v1612 = vld [vmem:[#allocation2 + $0xb8] sm:$0xff]
      %v1613 = vld [vmem:[#allocation2 + $0xc0] sm:$0xff]
      %v1614 = vld [vmem:[#allocation2 + $0xc8] sm:$0xff]
      %v1615 = vld [vmem:[#allocation2 + $0xd0] sm:$0xff]
      %v1618 = vunpack.c.l.b16 %v1587
      %v1619 = vunpack.c.h.b16 %v1587
      %v1620 = vunpack.c.l.b16 %v1588
      %v1621 = vunpack.c.h.b16 %v1588
      %v1622 = vpack.c.b16 %v1620, %v1618
      %v1623 = vpack.c.b16 %v1621, %v1619
      %v1626 = vsel %vm498, %v1623, 0
      %1628 = vmatprep.subr.bf16.mxu0 %v1590
      %1629 = vmatpush1.bf16.msra.mxu0 %v1589
      %1630 = vmatprep.subr.bf16.mxu0 %v1593
      %1631 = vmatpush1.bf16.msra.mxu0 %v1592
      %1632 = vmatprep.subr.bf16.mxu0 %v1596
      %1633 = vmatpush1.bf16.msra.mxu0 %v1595
      %1634 = vmatprep.subr.bf16.mxu0 %v1599
      %1635 = vmatpush1.bf16.msra.mxu0 %v1598
      %1636 = vmatprep.subr.bf16.mxu0 %v1602
      %1637 = vmatpush1.bf16.msra.mxu0 %v1601
      %1638 = vmatprep.subr.bf16.mxu0 %v1605
      %1639 = vmatpush1.bf16.msra.mxu0 %v1604
      %1640 = vmatprep.subr.bf16.mxu0 %v1608
      %1641 = vmatpush1.bf16.msra.mxu0 %v1607
      %1642 = vmatprep.subr.bf16.mxu0 %v1611
      %1643 = vmatpush1.bf16.msra.mxu0 %v1610
      %1644 = vmatprep.subr.bf16.mxu0 %v1614
      %1645 = vmatpush1.bf16.msra.mxu0 %v1613
      %1646 = vmatprep.subr.bf16.mxu0 0
      %1647 = vmatpush1.bf16.msra.mxu0 0
      %1648 = vmatprep.subr.bf16.mxu0 0
      %1649 = vmatpush1.bf16.msra.mxu0 0
      %1650 = vmatprep.subr.bf16.mxu0 0
      %1651 = vmatpush1.bf16.msra.mxu0 0
      %1652 = vmatprep.subr.bf16.mxu0 0
      %1653 = vmatpush1.bf16.msra.mxu0 0
      %1654 = vmatprep.subr.bf16.mxu0 0
      %1655 = vmatpush1.bf16.msra.mxu0 0
      %1656 = vmatprep.subr.bf16.mxu0 0
      %1657 = vmatpush1.bf16.msra.mxu0 0
      %1658 = vmatprep.subr.bf16.mxu0 0
      %1659 = vmatpush1.bf16.msra.mxu0 0
      %1660 = vmatprep.mubr.bf16.mxu0 %v1626
      %1661 = vmatmul.mubr.bf16.gmra.mrb[0].mxu0 %v1622
      %v1662 = vpop.f32.mrb[0].mxu0
      %v1663 = vadd.f32 0.0, %v1662
      %v1664 = vpop.f32.mrb[0].mxu0
      %v1665 = vadd.f32 0.0, %v1664
      %v1666 = vpop.f32.mrb[0].mxu0
      %v1667 = vadd.f32 0.0, %v1666
      %v1668 = vpop.f32.mrb[0].mxu0
      %v1669 = vadd.f32 0.0, %v1668
      %1670 = vdwg.mxu0
      %1671 = vmatprep.subr.bf16.mxu0 0
      %1672 = vmatpush1.bf16.msra.mxu0 %v1591
      %1673 = vmatprep.subr.bf16.mxu0 0
      %1674 = vmatpush1.bf16.msra.mxu0 %v1594
      %1675 = vmatprep.subr.bf16.mxu0 0
      %1676 = vmatpush1.bf16.msra.mxu0 %v1597
      %1677 = vmatprep.subr.bf16.mxu0 0
      %1678 = vmatpush1.bf16.msra.mxu0 %v1600
      %1679 = vmatprep.subr.bf16.mxu0 0
      %1680 = vmatpush1.bf16.msra.mxu0 %v1603
      %1681 = vmatprep.subr.bf16.mxu0 0
      %1682 = vmatpush1.bf16.msra.mxu0 %v1606
      %1683 = vmatprep.subr.bf16.mxu0 0
      %1684 = vmatpush1.bf16.msra.mxu0 %v1609
      %1685 = vmatprep.subr.bf16.mxu0 0
      %1686 = vmatpush1.bf16.msra.mxu0 %v1612
      %1687 = vmatprep.subr.bf16.mxu0 0
      %1688 = vmatpush1.bf16.msra.mxu0 %v1615
      %1689 = vmatprep.subr.bf16.mxu0 0
      %1690 = vmatpush1.bf16.msra.mxu0 0
      %1691 = vmatprep.subr.bf16.mxu0 0
      %1692 = vmatpush1.bf16.msra.mxu0 0
      %1693 = vmatprep.subr.bf16.mxu0 0
      %1694 = vmatpush1.bf16.msra.mxu0 0
      %1695 = vmatprep.subr.bf16.mxu0 0
      %1696 = vmatpush1.bf16.msra.mxu0 0
      %1697 = vmatprep.subr.bf16.mxu0 0
      %1698 = vmatpush1.bf16.msra.mxu0 0
      %1699 = vmatprep.subr.bf16.mxu0 0
      %1700 = vmatpush1.bf16.msra.mxu0 0
      %1701 = vmatprep.subr.bf16.mxu0 0
      %1702 = vmatpush1.bf16.msra.mxu0 0
      %1703 = vmatprep.mubr.bf16.mxu0 %v1626
      %1704 = vmatmul.mubr.bf16.gmra.mrb[0].mxu0 %v1622
      %v1705 = vpop.f32.mrb[0].mxu0
      %v1706 = vadd.f32 0.0, %v1705
      %v1707 = vpop.f32.mrb[0].mxu0
      %v1708 = vpop.f32.mrb[0].mxu0
      %v1709 = vadd.f32 0.0, %v1708
      %v1710 = vpop.f32.mrb[0].mxu0
      %1711 = vdwg.mxu0
      %s1712 = scalar_lea.vmem %s2, 48
      %v1713 = vld [vmem:[%s1712] sm:$0xff]
      %v1714 = vld [vmem:[%s1712 + $0x8] sm:$0xff]
      %1716 = vset.pattern.permute.xlu0 0
      %1717 = vperm.xlu0 %1716, %v1713
      %v1718 = vpop.permute.xlu0 %1717
      %1721 = vset.pattern.permute.xlu0 0
      %1722 = vperm.xlu0 %1721, %v1714
      %v1723 = vpop.permute.xlu0 %1722
      %v1725 = vmul.f32 %v1663, %v1718
      %v1726 = vmul.f32 %v1665, %v1718
      %v1727 = vmul.f32 %v1706, %v1718
      %v1728 = vmul.f32 %v1667, %v1723
      %v1729 = vmul.f32 %v1669, %v1723
      %v1730 = vmul.f32 %v1709, %v1723
      %s1731 = scalar_lea.vmem %s3, 48
      %v1732 = vld [vmem:[%s1731] sm:$0xff]
      %v1733 = vld [vmem:[%s1731 + $0x8] sm:$0xff]
      %1735 = vset.pattern.permute.xlu0 0
      %1736 = vperm.xlu0 %1735, %v1732
      %v1737 = vpop.permute.xlu0 %1736
      %1740 = vset.pattern.permute.xlu0 0
      %1741 = vperm.xlu0 %1740, %v1733
      %v1742 = vpop.permute.xlu0 %1741
      %v1744 = vadd.f32 %v1725, %v1737
      %v1745 = vadd.f32 %v1726, %v1737
      %v1746 = vadd.f32 %v1727, %v1737
      %v1747 = vadd.f32 %v1728, %v1742
      %v1748 = vadd.f32 %v1729, %v1742
      %v1749 = vadd.f32 %v1730, %v1742
      %v1750 = vmax.f32 %v1744, 0.0
      %v1751 = vmax.f32 %v1745, 0.0
      %v1752 = vmax.f32 %v1746, 0.0
      %v1753 = vmax.f32 %v1747, 0.0
      %v1754 = vmax.f32 %v1748, 0.0
      %v1755 = vmax.f32 %v1749, 0.0
      %v1756 = vmul.f32 %v1750, %v245
      %v1757 = vmul.f32 %v1751, %v246
      %v1758 = vmul.f32 %v1752, %v247
      %v1759 = vmul.f32 %v1753, %v245
      %v1760 = vmul.f32 %v1754, %v246
      %v1761 = vmul.f32 %v1755, %v247
      %1762 = vrot.lane.b32.xlu0 %v1756, 19
      %v1763 = vpop.permute.xlu0 %1762
      %1764 = vrot.lane.b32.xlu0 %v1759, 19
      %v1765 = vpop.permute.xlu0 %1764
      %1766 = vrot.lane.b32.xlu0 %v1757, 19
      %v1767 = vpop.permute.xlu0 %1766
      %1768 = vrot.lane.b32.xlu0 %v1760, 19
      %v1769 = vpop.permute.xlu0 %1768
      %1770 = vrot.lane.b32.xlu0 %v1758, 19
      %v1771 = vpop.permute.xlu0 %1770
      %1772 = vrot.lane.b32.xlu0 %v1761, 19
      %v1773 = vpop.permute.xlu0 %1772
      %v1774 = vsel %vm266, %v1767, %v1771
      %v1775 = vsel %vm266, %v1769, %v1773
      %v1776 = vsel %vm266, %v1763, %v1767
      %v1777 = vsel %vm266, %v1765, %v1769
      %v1778 = vsel %vm266, %v1771, %v1763
      %v1779 = vsel %vm266, %v1773, %v1765
      %v1780 = vpack.c.bf16 %v1779, %v1778
      %v1781 = vpack.c.bf16 %v1777, %v1776
      %v1782 = vpack.c.bf16 %v1775, %v1774
      %1783 = vst [vmem:[#allocation2] sm:$0xff] %v1780
      %1784 = vst [vmem:[#allocation2 + $0x8] sm:$0xff] %v1781
      %1785 = vst [vmem:[#allocation2 + $0x10] sm:$0xff] %v1782
      %1786 = vrot.lane.b32.xlu0 %v1756, 18
      %v1787 = vpop.permute.xlu0 %1786
      %1788 = vrot.lane.b32.xlu0 %v1759, 18
      %v1789 = vpop.permute.xlu0 %1788
      %1790 = vrot.lane.b32.xlu0 %v1757, 18
      %v1791 = vpop.permute.xlu0 %1790
      %1792 = vrot.lane.b32.xlu0 %v1760, 18
      %v1793 = vpop.permute.xlu0 %1792
      %1794 = vrot.lane.b32.xlu0 %v1758, 18
      %v1795 = vpop.permute.xlu0 %1794
      %1796 = vrot.lane.b32.xlu0 %v1761, 18
      %v1797 = vpop.permute.xlu0 %1796
      %v1798 = vsel %vm291, %v1791, %v1795
      %v1799 = vsel %vm291, %v1793, %v1797
      %v1800 = vsel %vm291, %v1787, %v1791
      %v1801 = vsel %vm291, %v1789, %v1793
      %v1802 = vsel %vm291, %v1795, %v1787
      %v1803 = vsel %vm291, %v1797, %v1789
      %v1804 = vpack.c.bf16 %v1803, %v1802
      %v1805 = vpack.c.bf16 %v1801, %v1800
      %v1806 = vpack.c.bf16 %v1799, %v1798
      %1807 = vst [vmem:[#allocation2 + $0x18] sm:$0xff] %v1804
      %1808 = vst [vmem:[#allocation2 + $0x20] sm:$0xff] %v1805
      %1809 = vst [vmem:[#allocation2 + $0x28] sm:$0xff] %v1806
      %1810 = vrot.lane.b32.xlu0 %v1756, 17
      %v1811 = vpop.permute.xlu0 %1810
      %1812 = vrot.lane.b32.xlu0 %v1759, 17
      %v1813 = vpop.permute.xlu0 %1812
      %1814 = vrot.lane.b32.xlu0 %v1757, 17
      %v1815 = vpop.permute.xlu0 %1814
      %1816 = vrot.lane.b32.xlu0 %v1760, 17
      %v1817 = vpop.permute.xlu0 %1816
      %1818 = vrot.lane.b32.xlu0 %v1758, 17
      %v1819 = vpop.permute.xlu0 %1818
      %1820 = vrot.lane.b32.xlu0 %v1761, 17
      %v1821 = vpop.permute.xlu0 %1820
      %v1822 = vsel %vm316, %v1815, %v1819
      %v1823 = vsel %vm316, %v1817, %v1821
      %v1824 = vsel %vm316, %v1811, %v1815
      %v1825 = vsel %vm316, %v1813, %v1817
      %v1826 = vsel %vm316, %v1819, %v1811
      %v1827 = vsel %vm316, %v1821, %v1813
      %v1828 = vpack.c.bf16 %v1827, %v1826
      %v1829 = vpack.c.bf16 %v1825, %v1824
      %v1830 = vpack.c.bf16 %v1823, %v1822
      %1831 = vst [vmem:[#allocation2 + $0x30] sm:$0xff] %v1828
      %1832 = vst [vmem:[#allocation2 + $0x38] sm:$0xff] %v1829
      %1833 = vst [vmem:[#allocation2 + $0x40] sm:$0xff] %v1830
      %1834 = vrot.lane.b32.xlu0 %v1756, 1
      %v1835 = vpop.permute.xlu0 %1834
      %1836 = vrot.lane.b32.xlu0 %v1759, 1
      %v1837 = vpop.permute.xlu0 %1836
      %1838 = vrot.lane.b32.xlu0 %v1757, 1
      %v1839 = vpop.permute.xlu0 %1838
      %1840 = vrot.lane.b32.xlu0 %v1760, 1
      %v1841 = vpop.permute.xlu0 %1840
      %1842 = vrot.lane.b32.xlu0 %v1758, 1
      %v1843 = vpop.permute.xlu0 %1842
      %1844 = vrot.lane.b32.xlu0 %v1761, 1
      %v1845 = vpop.permute.xlu0 %1844
      %v1846 = vsel %vm341, %v1839, %v1843
      %v1847 = vsel %vm341, %v1841, %v1845
      %v1848 = vsel %vm341, %v1835, %v1839
      %v1849 = vsel %vm341, %v1837, %v1841
      %v1850 = vsel %vm341, %v1843, %v1835
      %v1851 = vsel %vm341, %v1845, %v1837
      %v1852 = vpack.c.bf16 %v1851, %v1850
      %v1853 = vpack.c.bf16 %v1849, %v1848
      %v1854 = vpack.c.bf16 %v1847, %v1846
      %1855 = vst [vmem:[#allocation2 + $0x48] sm:$0xff] %v1852
      %1856 = vst [vmem:[#allocation2 + $0x50] sm:$0xff] %v1853
      %1857 = vst [vmem:[#allocation2 + $0x58] sm:$0xff] %v1854
      %v1858 = vpack.c.bf16 %v1759, %v1756
      %v1859 = vpack.c.bf16 %v1760, %v1757
      %v1860 = vpack.c.bf16 %v1761, %v1758
      %1861 = vst [vmem:[#allocation2 + $0x60] sm:$0xff] %v1858
      %1862 = vst [vmem:[#allocation2 + $0x68] sm:$0xff] %v1859
      %1863 = vst [vmem:[#allocation2 + $0x70] sm:$0xff] %v1860
      %1864 = vrot.lane.b32.xlu0 %v1756, 127
      %v1865 = vpop.permute.xlu0 %1864
      %1866 = vrot.lane.b32.xlu0 %v1759, 127
      %v1867 = vpop.permute.xlu0 %1866
      %1868 = vrot.lane.b32.xlu0 %v1757, 127
      %v1869 = vpop.permute.xlu0 %1868
      %1870 = vrot.lane.b32.xlu0 %v1760, 127
      %v1871 = vpop.permute.xlu0 %1870
      %1872 = vrot.lane.b32.xlu0 %v1758, 127
      %v1873 = vpop.permute.xlu0 %1872
      %1874 = vrot.lane.b32.xlu0 %v1761, 127
      %v1875 = vpop.permute.xlu0 %1874
      %v1876 = vsel %vm372, %v1869, %v1873
      %v1877 = vsel %vm372, %v1871, %v1875
      %v1878 = vsel %vm372, %v1865, %v1869
      %v1879 = vsel %vm372, %v1867, %v1871
      %v1880 = vsel %vm372, %v1873, %v1865
      %v1881 = vsel %vm372, %v1875, %v1867
      %v1882 = vpack.c.bf16 %v1879, %v1878
      %v1883 = vpack.c.bf16 %v1877, %v1876
      %v1884 = vpack.c.bf16 %v1881, %v1880
      %1885 = vst [vmem:[#allocation2 + $0x78] sm:$0xff] %v1882
      %1886 = vst [vmem:[#allocation2 + $0x80] sm:$0xff] %v1883
      %1887 = vst [vmem:[#allocation2 + $0x88] sm:$0xff] %v1884
      %1888 = vrot.lane.b32.xlu0 %v1756, 111
      %v1889 = vpop.permute.xlu0 %1888
      %1890 = vrot.lane.b32.xlu0 %v1759, 111
      %v1891 = vpop.permute.xlu0 %1890
      %1892 = vrot.lane.b32.xlu0 %v1757, 111
      %v1893 = vpop.permute.xlu0 %1892
      %1894 = vrot.lane.b32.xlu0 %v1760, 111
      %v1895 = vpop.permute.xlu0 %1894
      %1896 = vrot.lane.b32.xlu0 %v1758, 111
      %v1897 = vpop.permute.xlu0 %1896
      %1898 = vrot.lane.b32.xlu0 %v1761, 111
      %v1899 = vpop.permute.xlu0 %1898
      %v1900 = vsel %vm397, %v1893, %v1897
      %v1901 = vsel %vm397, %v1895, %v1899
      %v1902 = vsel %vm397, %v1889, %v1893
      %v1903 = vsel %vm397, %v1891, %v1895
      %v1904 = vsel %vm397, %v1897, %v1889
      %v1905 = vsel %vm397, %v1899, %v1891
      %v1906 = vpack.c.bf16 %v1903, %v1902
      %v1907 = vpack.c.bf16 %v1901, %v1900
      %v1908 = vpack.c.bf16 %v1905, %v1904
      %1909 = vst [vmem:[#allocation2 + $0x90] sm:$0xff] %v1906
      %1910 = vst [vmem:[#allocation2 + $0x98] sm:$0xff] %v1907
      %1911 = vst [vmem:[#allocation2 + $0xa0] sm:$0xff] %v1908
      %1912 = vrot.lane.b32.xlu0 %v1756, 110
      %v1913 = vpop.permute.xlu0 %1912
      %1914 = vrot.lane.b32.xlu0 %v1759, 110
      %v1915 = vpop.permute.xlu0 %1914
      %1916 = vrot.lane.b32.xlu0 %v1757, 110
      %v1917 = vpop.permute.xlu0 %1916
      %1918 = vrot.lane.b32.xlu0 %v1760, 110
      %v1919 = vpop.permute.xlu0 %1918
      %1920 = vrot.lane.b32.xlu0 %v1758, 110
      %v1921 = vpop.permute.xlu0 %1920
      %1922 = vrot.lane.b32.xlu0 %v1761, 110
      %v1923 = vpop.permute.xlu0 %1922
      %v1924 = vsel %vm422, %v1917, %v1921
      %v1925 = vsel %vm422, %v1919, %v1923
      %v1926 = vsel %vm422, %v1913, %v1917
      %v1927 = vsel %vm422, %v1915, %v1919
      %v1928 = vsel %vm422, %v1921, %v1913
      %v1929 = vsel %vm422, %v1923, %v1915
      %v1930 = vpack.c.bf16 %v1927, %v1926
      %v1931 = vpack.c.bf16 %v1925, %v1924
      %v1932 = vpack.c.bf16 %v1929, %v1928
      %1933 = vst [vmem:[#allocation2 + $0xa8] sm:$0xff] %v1930
      %1934 = vst [vmem:[#allocation2 + $0xb0] sm:$0xff] %v1931
      %1935 = vst [vmem:[#allocation2 + $0xb8] sm:$0xff] %v1932
      %1936 = vrot.lane.b32.xlu0 %v1756, 109
      %v1937 = vpop.permute.xlu0 %1936
      %1938 = vrot.lane.b32.xlu0 %v1759, 109
      %v1939 = vpop.permute.xlu0 %1938
      %1940 = vrot.lane.b32.xlu0 %v1757, 109
      %v1941 = vpop.permute.xlu0 %1940
      %1942 = vrot.lane.b32.xlu0 %v1760, 109
      %v1943 = vpop.permute.xlu0 %1942
      %1944 = vrot.lane.b32.xlu0 %v1758, 109
      %v1945 = vpop.permute.xlu0 %1944
      %1946 = vrot.lane.b32.xlu0 %v1761, 109
      %v1947 = vpop.permute.xlu0 %1946
      %v1948 = vsel %vm447, %v1941, %v1945
      %v1949 = vsel %vm447, %v1943, %v1947
      %v1950 = vsel %vm447, %v1937, %v1941
      %v1951 = vsel %vm447, %v1939, %v1943
      %v1952 = vsel %vm447, %v1945, %v1937
      %v1953 = vsel %vm447, %v1947, %v1939
      %v1954 = vpack.c.bf16 %v1951, %v1950
      %v1955 = vpack.c.bf16 %v1949, %v1948
      %v1956 = vpack.c.bf16 %v1953, %v1952
      %1957 = vst [vmem:[#allocation2 + $0xc0] sm:$0xff] %v1954
      %1958 = vst [vmem:[#allocation2 + $0xc8] sm:$0xff] %v1955
      %1959 = vst [vmem:[#allocation2 + $0xd0] sm:$0xff] %v1956
      %s1960 = scalar_lea.vmem %s1, 64
      %v1961 = vld [vmem:[%s1960] sm:$0xff]
      %v1962 = vld [vmem:[%s1960 + $0x8] sm:$0xff]
      %v1963 = vld [vmem:[#allocation2] sm:$0xff]
      %v1964 = vld [vmem:[#allocation2 + $0x8] sm:$0xff]
      %v1965 = vld [vmem:[#allocation2 + $0x10] sm:$0xff]
      %v1966 = vld [vmem:[#allocation2 + $0x18] sm:$0xff]
      %v1967 = vld [vmem:[#allocation2 + $0x20] sm:$0xff]
      %v1968 = vld [vmem:[#allocation2 + $0x28] sm:$0xff]
      %v1969 = vld [vmem:[#allocation2 + $0x30] sm:$0xff]
      %v1970 = vld [vmem:[#allocation2 + $0x38] sm:$0xff]
      %v1971 = vld [vmem:[#allocation2 + $0x40] sm:$0xff]
      %v1972 = vld [vmem:[#allocation2 + $0x48] sm:$0xff]
      %v1973 = vld [vmem:[#allocation2 + $0x50] sm:$0xff]
      %v1974 = vld [vmem:[#allocation2 + $0x58] sm:$0xff]
      %v1975 = vld [vmem:[#allocation2 + $0x60] sm:$0xff]
      %v1976 = vld [vmem:[#allocation2 + $0x68] sm:$0xff]
      %v1977 = vld [vmem:[#allocation2 + $0x70] sm:$0xff]
      %v1978 = vld [vmem:[#allocation2 + $0x78] sm:$0xff]
      %v1979 = vld [vmem:[#allocation2 + $0x80] sm:$0xff]
      %v1980 = vld [vmem:[#allocation2 + $0x88] sm:$0xff]
      %v1981 = vld [vmem:[#allocation2 + $0x90] sm:$0xff]
      %v1982 = vld [vmem:[#allocation2 + $0x98] sm:$0xff]
      %v1983 = vld [vmem:[#allocation2 + $0xa0] sm:$0xff]
      %v1984 = vld [vmem:[#allocation2 + $0xa8] sm:$0xff]
      %v1985 = vld [vmem:[#allocation2 + $0xb0] sm:$0xff]
      %v1986 = vld [vmem:[#allocation2 + $0xb8] sm:$0xff]
      %v1987 = vld [vmem:[#allocation2 + $0xc0] sm:$0xff]
      %v1988 = vld [vmem:[#allocation2 + $0xc8] sm:$0xff]
      %v1989 = vld [vmem:[#allocation2 + $0xd0] sm:$0xff]
      %v1992 = vunpack.c.l.b16 %v1961
      %v1993 = vunpack.c.h.b16 %v1961
      %v1994 = vunpack.c.l.b16 %v1962
      %v1995 = vunpack.c.h.b16 %v1962
      %v1996 = vpack.c.b16 %v1994, %v1992
      %v1997 = vpack.c.b16 %v1995, %v1993
      %v2000 = vsel %vm498, %v1997, 0
      %2002 = vmatprep.subr.bf16.mxu0 %v1964
      %2003 = vmatpush1.bf16.msra.mxu0 %v1963
      %2004 = vmatprep.subr.bf16.mxu0 %v1967
      %2005 = vmatpush1.bf16.msra.mxu0 %v1966
      %2006 = vmatprep.subr.bf16.mxu0 %v1970
      %2007 = vmatpush1.bf16.msra.mxu0 %v1969
      %2008 = vmatprep.subr.bf16.mxu0 %v1973
      %2009 = vmatpush1.bf16.msra.mxu0 %v1972
      %2010 = vmatprep.subr.bf16.mxu0 %v1976
      %2011 = vmatpush1.bf16.msra.mxu0 %v1975
      %2012 = vmatprep.subr.bf16.mxu0 %v1979
      %2013 = vmatpush1.bf16.msra.mxu0 %v1978
      %2014 = vmatprep.subr.bf16.mxu0 %v1982
      %2015 = vmatpush1.bf16.msra.mxu0 %v1981
      %2016 = vmatprep.subr.bf16.mxu0 %v1985
      %2017 = vmatpush1.bf16.msra.mxu0 %v1984
      %2018 = vmatprep.subr.bf16.mxu0 %v1988
      %2019 = vmatpush1.bf16.msra.mxu0 %v1987
      %2020 = vmatprep.subr.bf16.mxu0 0
      %2021 = vmatpush1.bf16.msra.mxu0 0
      %2022 = vmatprep.subr.bf16.mxu0 0
      %2023 = vmatpush1.bf16.msra.mxu0 0
      %2024 = vmatprep.subr.bf16.mxu0 0
      %2025 = vmatpush1.bf16.msra.mxu0 0
      %2026 = vmatprep.subr.bf16.mxu0 0
      %2027 = vmatpush1.bf16.msra.mxu0 0
      %2028 = vmatprep.subr.bf16.mxu0 0
      %2029 = vmatpush1.bf16.msra.mxu0 0
      %2030 = vmatprep.subr.bf16.mxu0 0
      %2031 = vmatpush1.bf16.msra.mxu0 0
      %2032 = vmatprep.subr.bf16.mxu0 0
      %2033 = vmatpush1.bf16.msra.mxu0 0
      %2034 = vmatprep.mubr.bf16.mxu0 %v2000
      %2035 = vmatmul.mubr.bf16.gmra.mrb[0].mxu0 %v1996
      %v2036 = vpop.f32.mrb[0].mxu0
      %v2037 = vadd.f32 0.0, %v2036
      %v2038 = vpop.f32.mrb[0].mxu0
      %v2039 = vadd.f32 0.0, %v2038
      %v2040 = vpop.f32.mrb[0].mxu0
      %v2041 = vadd.f32 0.0, %v2040
      %v2042 = vpop.f32.mrb[0].mxu0
      %v2043 = vadd.f32 0.0, %v2042
      %2044 = vdwg.mxu0
      %2045 = vmatprep.subr.bf16.mxu0 0
      %2046 = vmatpush1.bf16.msra.mxu0 %v1965
      %2047 = vmatprep.subr.bf16.mxu0 0
      %2048 = vmatpush1.bf16.msra.mxu0 %v1968
      %2049 = vmatprep.subr.bf16.mxu0 0
      %2050 = vmatpush1.bf16.msra.mxu0 %v1971
      %2051 = vmatprep.subr.bf16.mxu0 0
      %2052 = vmatpush1.bf16.msra.mxu0 %v1974
      %2053 = vmatprep.subr.bf16.mxu0 0
      %2054 = vmatpush1.bf16.msra.mxu0 %v1977
      %2055 = vmatprep.subr.bf16.mxu0 0
      %2056 = vmatpush1.bf16.msra.mxu0 %v1980
      %2057 = vmatprep.subr.bf16.mxu0 0
      %2058 = vmatpush1.bf16.msra.mxu0 %v1983
      %2059 = vmatprep.subr.bf16.mxu0 0
      %2060 = vmatpush1.bf16.msra.mxu0 %v1986
      %2061 = vmatprep.subr.bf16.mxu0 0
      %2062 = vmatpush1.bf16.msra.mxu0 %v1989
      %2063 = vmatprep.subr.bf16.mxu0 0
      %2064 = vmatpush1.bf16.msra.mxu0 0
      %2065 = vmatprep.subr.bf16.mxu0 0
      %2066 = vmatpush1.bf16.msra.mxu0 0
      %2067 = vmatprep.subr.bf16.mxu0 0
      %2068 = vmatpush1.bf16.msra.mxu0 0
      %2069 = vmatprep.subr.bf16.mxu0 0
      %2070 = vmatpush1.bf16.msra.mxu0 0
      %2071 = vmatprep.subr.bf16.mxu0 0
      %2072 = vmatpush1.bf16.msra.mxu0 0
      %2073 = vmatprep.subr.bf16.mxu0 0
      %2074 = vmatpush1.bf16.msra.mxu0 0
      %2075 = vmatprep.subr.bf16.mxu0 0
      %2076 = vmatpush1.bf16.msra.mxu0 0
      %2077 = vmatprep.mubr.bf16.mxu0 %v2000
      %2078 = vmatmul.mubr.bf16.gmra.mrb[0].mxu0 %v1996
      %v2079 = vpop.f32.mrb[0].mxu0
      %v2080 = vadd.f32 0.0, %v2079
      %v2081 = vpop.f32.mrb[0].mxu0
      %v2082 = vpop.f32.mrb[0].mxu0
      %v2083 = vadd.f32 0.0, %v2082
      %v2084 = vpop.f32.mrb[0].mxu0
      %2085 = vdwg.mxu0
      %s2086 = scalar_lea.vmem %s2, 64
      %v2087 = vld [vmem:[%s2086] sm:$0xff]
      %v2088 = vld [vmem:[%s2086 + $0x8] sm:$0xff]
      %2090 = vset.pattern.permute.xlu0 0
      %2091 = vperm.xlu0 %2090, %v2087
      %v2092 = vpop.permute.xlu0 %2091
      %2095 = vset.pattern.permute.xlu0 0
      %2096 = vperm.xlu0 %2095, %v2088
      %v2097 = vpop.permute.xlu0 %2096
      %v2099 = vmul.f32 %v2037, %v2092
      %v2100 = vmul.f32 %v2039, %v2092
      %v2101 = vmul.f32 %v2080, %v2092
      %v2102 = vmul.f32 %v2041, %v2097
      %v2103 = vmul.f32 %v2043, %v2097
      %v2104 = vmul.f32 %v2083, %v2097
      %s2105 = scalar_lea.vmem %s3, 64
      %v2106 = vld [vmem:[%s2105] sm:$0xff]
      %v2107 = vld [vmem:[%s2105 + $0x8] sm:$0xff]
      %2109 = vset.pattern.permute.xlu0 0
      %2110 = vperm.xlu0 %2109, %v2106
      %v2111 = vpop.permute.xlu0 %2110
      %2114 = vset.pattern.permute.xlu0 0
      %2115 = vperm.xlu0 %2114, %v2107
      %v2116 = vpop.permute.xlu0 %2115
      %v2118 = vadd.f32 %v2099, %v2111
      %v2119 = vadd.f32 %v2100, %v2111
      %v2120 = vadd.f32 %v2101, %v2111
      %v2121 = vadd.f32 %v2102, %v2116
      %v2122 = vadd.f32 %v2103, %v2116
      %v2123 = vadd.f32 %v2104, %v2116
      %v2124 = vmax.f32 %v2118, 0.0
      %v2125 = vmax.f32 %v2119, 0.0
      %v2126 = vmax.f32 %v2120, 0.0
      %v2127 = vmax.f32 %v2121, 0.0
      %v2128 = vmax.f32 %v2122, 0.0
      %v2129 = vmax.f32 %v2123, 0.0
      %v2130 = vadd.f32 %v2124, %v1382
      %v2131 = vadd.f32 %v2125, %v1383
      %v2132 = vadd.f32 %v2126, %v1384
      %v2133 = vadd.f32 %v2127, %v1385
      %v2134 = vadd.f32 %v2128, %v1386
      %v2135 = vadd.f32 %v2129, %v1387
      %v2136 = vmul.f32 %v2130, %v245
      %v2137 = vmul.f32 %v2131, %v246
      %v2138 = vmul.f32 %v2132, %v247
      %v2139 = vmul.f32 %v2133, %v245
      %v2140 = vmul.f32 %v2134, %v246
      %v2141 = vmul.f32 %v2135, %v247
      %2148 = vrot.lane.b32.xlu0 %v2136, 110
      %v2149 = vpop.permute.xlu0 %2148
      %2150 = vrot.lane.b32.xlu0 %v2137, 110
      %v2151 = vpop.permute.xlu0 %2150
      %2152 = vrot.lane.b32.xlu0 %v2138, 110
      %v2153 = vpop.permute.xlu0 %2152
      %2154 = vrot.lane.b32.xlu0 %v2139, 110
      %v2155 = vpop.permute.xlu0 %2154
      %2156 = vrot.lane.b32.xlu0 %v2140, 110
      %v2157 = vpop.permute.xlu0 %2156
      %2158 = vrot.lane.b32.xlu0 %v2141, 110
      %v2159 = vpop.permute.xlu0 %2158
      %vm2160 = vcmask 900096
      %v2161 = vsel %vm2160, %v2149, %v2151
      %v2162 = vsel %vm2160, %v2151, %v2153
      %v2163 = vsel %vm2160, %v2155, %v2157
      %v2164 = vsel %vm2160, %v2157, %v2159
      %2171 = vst [vmem:[%s197] sm:$0xff] %v2161
      %2172 = vst [vmem:[%s197 + $0x8] sm:$0xff] %v2162
      %vm2173 = vcmask 261120
      %2174 = vst.msk [vmem:[%s197 + $0x10] sm:$0xff] %vm2173, %v2153
      %2175 = vst [vmem:[%s197 + $0x18] sm:$0xff] %v2163
      %2176 = vst [vmem:[%s197 + $0x20] sm:$0xff] %v2164
      %2177 = vst.msk [vmem:[%s197 + $0x28] sm:$0xff] %vm2173, %v2159
      %p2178 = scmp.lt.s32.totalorder %s15, 1
      %s2179 = scalar_select %p2178, %s15, 1
      %s2180 = smul.addr %s2179, 6
      %s2181 = smul.addr %s2180, 8
      %s2182 = scalar_lea.vmem %s4, %s2181
      // Predicated region
      $region37: #{residual_module_forward.1} parent=35 // pred_check
        %p2183 = pneg %p122
      $region38: #{residual_module_forward.1} parent=35 // pred_check_branch
        %2185 = sbr.rel (%p2183) target = $region40
      $region39: #{residual_module_forward.1} parent=35 // pred_region
        _
      $region40: #{residual_module_forward.1} parent=35 // pred_fallthru
        _
    $region36: #{residual_module_forward.1} parent=5 // pred_fallthru
      _
    %p2186 = scmp.le.s32.totalorder 2, %s10
    // Predicated region
    $region41: #{residual_module_forward.1} parent=5 // pred_check
      %p2187 = pneg %p2186
    $region42: #{residual_module_forward.1} parent=5 // pred_check_branch
      %2189 = sbr.rel (%p2187) target = $region44
    $region43: #{residual_module_forward.1} parent=5 // pred_region
      %s2190 = ssub.s32 %s10, 2
      // Predicated region
      $region45: #{residual_module_forward.1} parent=43 // pred_check
        %p2191 = pneg %p128
      $region46: #{residual_module_forward.1} parent=43 // pred_check_branch
        %2193 = sbr.rel (%p2191) target = $region48
      $region47: #{residual_module_forward.1} parent=43 // pred_region
        %p2194 = scmp.lt.s32.totalorder %s16, 1
        %s2195 = scalar_select %p2194, %s16, 1
        %s2196 = smul.addr %s2195, 6
        %s2197 = smul.addr %s2196, 8
        %s2198 = scalar_lea.vmem %s4, %s2197
      $region48: #{residual_module_forward.1} parent=43 // pred_fallthru
        _
    $region44: #{residual_module_forward.1} parent=5 // pred_fallthru
      _
  $region6: #{residual_module_forward.1} parent=0 // loop_footer
    %s14 = sadd.s32 1, %s10
  $region7: #{residual_module_forward.1} parent=0 // loop_footer_branch
    %9 = sbr.rel target = $region3
  $region8: #{residual_module_forward.1} parent=0 // loop_exit
    _

</llo_original>
